<compile_context>
chip_gen: v6e
topology: v6e:2x2x1
jax: 0.10.0
libtpu: 0.0.40
codegen_flags: <defaults>
</compile_context>

<pallas_src>
import jax
import jax.numpy as jnp
from jax.experimental import pallas as pl
from jax.experimental.pallas import tpu as pltpu

HEAD_LANES = 128  # lane-dense width for the (padded) MLP head


def lstm_head_kernel(x_ref, wih0_ref, whh0_ref, b0_ref,
                     wih1_ref, whh1_ref, b1_ref,
                     wl_ref, bl_ref, wl2_ref, bl2_ref, out_ref):
    """Whole forward pass in one kernel invocation.

    x_ref   : (seq*B_pad, D) bf16      flattened, batch-padded input sequence
    wih0_ref: (D, 4H) bf16, whh0_ref: (H, 4H) bf16, b0_ref: (1, 4H) f32
    wih1_ref: (H, 4H) bf16, whh1_ref: (H, 4H) bf16, b1_ref: (1, 4H) f32
    wl_ref  : (H, 128) bf16, bl_ref: (1, 128) f32    Linear(H,64) zero-padded
    wl2_ref : (128,128) bf16, bl2_ref: (1,128) f32   Linear(64,1) zero-padded
    out_ref : (B_pad, 128) f32                       lane-dense slab (col 0 real)
    """
    B = out_ref.shape[0]
    seq = x_ref.shape[0] // B
    H4 = whh0_ref.shape[1]
    H = H4 // 4
    bf = jnp.bfloat16

    # Lane mask selecting the g-gate (tanh) lanes of the (B, 4H) gate tile.
    lane = jax.lax.broadcasted_iota(jnp.int32, (B, H4), 1)
    g_mask = (lane >= 2 * H) & (lane < 3 * H)

    def activate(gates):
        # Single EUP tanh per tile: sigmoid(x) = 0.5*tanh(x/2) + 0.5.
        pre = jnp.where(g_mask, gates, 0.5 * gates)
        t = jnp.tanh(pre)
        return jnp.where(g_mask, t, 0.5 * t + 0.5)

    def lstm_update(act, c_prev):
        i = act[:, 0 * H:1 * H]
        f = act[:, 1 * H:2 * H]
        g = act[:, 2 * H:3 * H]
        o = act[:, 3 * H:4 * H]
        c_new = f * c_prev + i * g
        h_new = o * jnp.tanh(c_new)
        return h_new, c_new

    # Layer-0 input contribution for ALL timesteps in one MXU pass
    # ((seq*B, D) x (D, 4H)); b0 folded in here (single broadcast).
    ih0 = jnp.dot(x_ref[...], wih0_ref[...],
                  preferred_element_type=jnp.float32) + b0_ref[...]

    # Recurrent weights held as bf16 values (6 vregs); biases hoisted.
    whh0 = whh0_ref[...]
    wih1 = wih1_ref[...]
    whh1 = whh1_ref[...]
    b1 = jnp.broadcast_to(b1_ref[...], (B, H4))

    z = jnp.zeros((B, H), jnp.float32)
    h0, c0, h1, c1 = z, z, z, z
    for t in range(seq):  # seq is small; fully unrolled with static slices.
        # hh1 depends only on h1_{t-1}: push it to the MXU first so it overlaps
        # layer-0's activations/elementwise (different VLIW slots).
        hh1 = jnp.dot(h1.astype(bf), whh1, preferred_element_type=jnp.float32)

        gates0 = ih0[t * B:(t + 1) * B, :] + jnp.dot(
            h0.astype(bf), whh0, preferred_element_type=jnp.float32)
        h0, c0 = lstm_update(activate(gates0), c0)

        gates1 = jnp.dot(h0.astype(bf), wih1,
                         preferred_element_type=jnp.float32) + hh1 + b1
        h1, c1 = lstm_update(activate(gates1), c1)

    # Head on out[-1] (layer-2 hidden at final step), lane-dense padded output.
    zh = jnp.dot(h1.astype(bf), wl_ref[...],
                 preferred_element_type=jnp.float32) + bl_ref[...]
    zh = jnp.where(zh >= 0, zh, 0.2 * zh)          # LeakyReLU(0.2)
    y = jnp.dot(zh.astype(bf), wl2_ref[...],
                preferred_element_type=jnp.float32) + bl2_ref[...]
    out_ref[...] = y.astype(out_ref.dtype)


def pack_params(raw):
    """Pack raw PyTorch-layout params into kernel layout (bf16 weights, padded).

    Call ONCE per parameter set; the packed tuple is what the jitted forward takes.
    """
    wih0, whh0, b0, wih1, whh1, b1, wl, bl, wl2, bl2 = raw
    H = whh0.shape[1]
    F = wl.shape[0]  # 64
    bf = jnp.bfloat16

    wih0_t = wih0.T.astype(bf)   # (D, 4H)
    whh0_t = whh0.T.astype(bf)   # (H, 4H)
    wih1_t = wih1.T.astype(bf)   # (H, 4H)
    whh1_t = whh1.T.astype(bf)   # (H, 4H)

    wl_pad = jnp.zeros((H, HEAD_LANES), bf).at[:, :F].set(wl.T.astype(bf))
    bl_pad = jnp.zeros((1, HEAD_LANES), jnp.float32).at[:, :F].set(bl[None, :])
    wl2_pad = jnp.zeros((HEAD_LANES, HEAD_LANES), bf).at[:F, :1].set(wl2.T.astype(bf))
    bl2_pad = jnp.zeros((1, HEAD_LANES), jnp.float32).at[:, :1].set(bl2[None, :])

    return (wih0_t, whh0_t, b0[None, :].astype(jnp.float32),
            wih1_t, whh1_t, b1[None, :].astype(jnp.float32),
            wl_pad, bl_pad, wl2_pad, bl2_pad)


def lstm_forward(x, packed_params):
    """x: (seq, batch, input_dim) f32.  Returns (batch, 1) f32."""
    seq, batch, input_dim = x.shape

    # Pad batch to the 8-sublane tile; flatten (seq, B_pad) into the M axis so
    # the layer-0 ih matmul for all timesteps is a single MXU pass.
    b_pad = ((batch + 7) // 8) * 8
    x_pad = jnp.zeros((seq, b_pad, input_dim), jnp.bfloat16)
    x_pad = x_pad.at[:, :batch, :].set(x.astype(jnp.bfloat16))
    x_flat = x_pad.reshape(seq * b_pad, input_dim)

    vmem_spec = pl.BlockSpec(memory_space=pltpu.MemorySpace.VMEM)
    out = pl.pallas_call(
        lstm_head_kernel,
        out_shape=jax.ShapeDtypeStruct((b_pad, HEAD_LANES), jnp.float32),
        in_specs=[vmem_spec] * (1 + len(packed_params)),
        out_specs=vmem_spec,
    )(x_flat, *packed_params)
    return out[:batch, :1]


lstm_forward_jit = jax.jit(lstm_forward)


def reference_forward(x, raw):
    """Pure-JAX f32 reference matching PyTorch nn.LSTM semantics (gate order i,f,g,o)."""
    wih0, whh0, b0, wih1, whh1, b1, wl, bl, wl2, bl2 = raw
    seq, batch, _ = x.shape
    H = whh0.shape[1]

    def cell(x_in, h, c, wih, whh, b):
        g = x_in @ wih.T + h @ whh.T + b
        i = jax.nn.sigmoid(g[:, 0 * H:1 * H])
        f = jax.nn.sigmoid(g[:, 1 * H:2 * H])
        gg = jnp.tanh(g[:, 2 * H:3 * H])
        o = jax.nn.sigmoid(g[:, 3 * H:4 * H])
        c = f * c + i * gg
        h = o * jnp.tanh(c)
        return h, c

    h0 = c0 = h1 = c1 = jnp.zeros((batch, H), jnp.float32)
    for t in range(seq):
        h0, c0 = cell(x[t], h0, c0, wih0, whh0, b0)
        h1, c1 = cell(h0, h1, c1, wih1, whh1, b1)
    z = h1 @ wl.T + bl
    z = jnp.where(z >= 0, z, 0.2 * z)
    return z @ wl2.T + bl2


def make_params(key, input_dim, hidden_dim, head_dim=64):
    """PyTorch-style uniform(-1/sqrt(H), 1/sqrt(H)) init, PyTorch layouts."""
    H = hidden_dim
    bound = 1.0 / (H ** 0.5)
    ks = jax.random.split(key, 12)

    def u(k, shape, b):
        return jax.random.uniform(k, shape, jnp.float32, -b, b)

    wih0 = u(ks[0], (4 * H, input_dim), bound)
    whh0 = u(ks[1], (4 * H, H), bound)
    b0 = u(ks[2], (4 * H,), bound) + u(ks[3], (4 * H,), bound)   # b_ih + b_hh
    wih1 = u(ks[4], (4 * H, H), bound)
    whh1 = u(ks[5], (4 * H, H), bound)
    b1 = u(ks[6], (4 * H,), bound) + u(ks[7], (4 * H,), bound)

    bl_lin = 1.0 / (H ** 0.5)
    wl = u(ks[8], (head_dim, H), bl_lin)
    bl = u(ks[9], (head_dim,), bl_lin)
    bl2_lin = 1.0 / (head_dim ** 0.5)
    wl2 = u(ks[10], (1, head_dim), bl2_lin)
    bl2 = u(ks[11], (1,), bl2_lin)

    return (wih0, whh0, b0, wih1, whh1, b1, wl, bl, wl2, bl2)


if __name__ == "__main__":
    # Small shapes consistent with the module's forward (seq, batch, input_dim).
    SEQ, BATCH, INPUT_DIM, HIDDEN_DIM = 8, 2, 32, 32

    key = jax.random.PRNGKey(0)
    kx, kp = jax.random.split(key)
    x = jax.random.normal(kx, (SEQ, BATCH, INPUT_DIM), dtype=jnp.float32)
    # market_features is unused by the PyTorch forward(); it is omitted here.
    raw_params = make_params(kp, INPUT_DIM, HIDDEN_DIM)

    packed = pack_params(raw_params)          # pack once, outside the hot path
    out = jax.block_until_ready(lstm_forward_jit(x, packed))
    ref = reference_forward(x, raw_params)

    assert out.shape == (BATCH, 1), out.shape
    # bf16 MXU operands vs f32 reference: tolerance loosened per review.
    assert jnp.allclose(out, ref, atol=5e-2, rtol=5e-2), (out, ref)

    print("KERNEL_OK")
</pallas_src>

<mosaic_0001>
module attributes {stable_mosaic.version = 11 : i64} {
  func.func @lstm_head_kernel(%arg0: memref<64x32xbf16, #tpu.memory_space<vmem>>, %arg1: memref<32x128xbf16, #tpu.memory_space<vmem>>, %arg2: memref<32x128xbf16, #tpu.memory_space<vmem>>, %arg3: memref<1x128xf32, #tpu.memory_space<vmem>>, %arg4: memref<32x128xbf16, #tpu.memory_space<vmem>>, %arg5: memref<32x128xbf16, #tpu.memory_space<vmem>>, %arg6: memref<1x128xf32, #tpu.memory_space<vmem>>, %arg7: memref<32x128xbf16, #tpu.memory_space<vmem>>, %arg8: memref<1x128xf32, #tpu.memory_space<vmem>>, %arg9: memref<128x128xbf16, #tpu.memory_space<vmem>>, %arg10: memref<1x128xf32, #tpu.memory_space<vmem>>, %arg11: memref<8x128xf32, #tpu.memory_space<vmem>>) attributes {dimension_semantics = [], scalar_prefetch = 0 : i64, scratch_operands = 0 : i64, tpu.core_type = #tpu.core_type<tc>} {
    %0 = tpu.iota {dimensions = array<i32: 1>} : vector<8x128xi32>
    %c64_i32 = arith.constant 64 : i32
    %1 = vector.broadcast %c64_i32 : i32 to vector<8x128xi32>
    %2 = arith.cmpi sge, %0, %1 : vector<8x128xi32>
    %c96_i32 = arith.constant 96 : i32
    %3 = vector.broadcast %c96_i32 : i32 to vector<8x128xi32>
    %4 = arith.cmpi slt, %0, %3 : vector<8x128xi32>
    %5 = arith.andi %2, %4 : vector<8x128xi1>
    %c0 = arith.constant 0 : index
    %c0_0 = arith.constant 0 : index
    %6 = vector.load %arg0[%c0, %c0_0] : memref<64x32xbf16, #tpu.memory_space<vmem>>, vector<64x32xbf16>
    %c0_1 = arith.constant 0 : index
    %c0_2 = arith.constant 0 : index
    %7 = vector.load %arg1[%c0_1, %c0_2] : memref<32x128xbf16, #tpu.memory_space<vmem>>, vector<32x128xbf16>
    %cst = arith.constant dense<0.000000e+00> : vector<64x128xf32>
    %8 = tpu.matmul %6, %7, %cst {dimension_numbers = #tpu.dot_dimension_numbers<[1], [0], [0], [1], [0, 0, 1, 1], [], []>} : vector<64x32xbf16>, vector<32x128xbf16>, vector<64x128xf32> -> vector<64x128xf32>
    %c0_3 = arith.constant 0 : index
    %c0_4 = arith.constant 0 : index
    %9 = vector.load %arg3[%c0_3, %c0_4] : memref<1x128xf32, #tpu.memory_space<vmem>>, vector<1x128xf32>
    %10 = vector.broadcast %9 : vector<1x128xf32> to vector<64x128xf32>
    %11 = arith.addf %8, %10 : vector<64x128xf32>
    %c0_5 = arith.constant 0 : index
    %c0_6 = arith.constant 0 : index
    %12 = vector.load %arg2[%c0_5, %c0_6] : memref<32x128xbf16, #tpu.memory_space<vmem>>, vector<32x128xbf16>
    %c0_7 = arith.constant 0 : index
    %c0_8 = arith.constant 0 : index
    %13 = vector.load %arg4[%c0_7, %c0_8] : memref<32x128xbf16, #tpu.memory_space<vmem>>, vector<32x128xbf16>
    %c0_9 = arith.constant 0 : index
    %c0_10 = arith.constant 0 : index
    %14 = vector.load %arg5[%c0_9, %c0_10] : memref<32x128xbf16, #tpu.memory_space<vmem>>, vector<32x128xbf16>
    %c0_11 = arith.constant 0 : index
    %c0_12 = arith.constant 0 : index
    %15 = vector.load %arg6[%c0_11, %c0_12] : memref<1x128xf32, #tpu.memory_space<vmem>>, vector<1x128xf32>
    %16 = vector.shape_cast %15 : vector<1x128xf32> to vector<1x128xf32>
    %17 = vector.broadcast %16 : vector<1x128xf32> to vector<8x128xf32>
    %cst_13 = arith.constant 0.000000e+00 : f32
    %18 = vector.broadcast %cst_13 : f32 to vector<8x32xf32>
    %19 = arith.truncf %18 : vector<8x32xf32> to vector<8x32xbf16>
    %cst_14 = arith.constant dense<0.000000e+00> : vector<8x128xf32>
    %20 = tpu.matmul %19, %14, %cst_14 {dimension_numbers = #tpu.dot_dimension_numbers<[1], [0], [0], [1], [0, 0, 1, 1], [], []>} : vector<8x32xbf16>, vector<32x128xbf16>, vector<8x128xf32> -> vector<8x128xf32>
    %21 = vector.extract_strided_slice %11 {offsets = [0, 0], sizes = [8, 128], strides = [1, 1]} : vector<64x128xf32> to vector<8x128xf32>
    %22 = arith.truncf %18 : vector<8x32xf32> to vector<8x32xbf16>
    %cst_15 = arith.constant dense<0.000000e+00> : vector<8x128xf32>
    %23 = tpu.matmul %22, %12, %cst_15 {dimension_numbers = #tpu.dot_dimension_numbers<[1], [0], [0], [1], [0, 0, 1, 1], [], []>} : vector<8x32xbf16>, vector<32x128xbf16>, vector<8x128xf32> -> vector<8x128xf32>
    %24 = arith.addf %21, %23 : vector<8x128xf32>
    %cst_16 = arith.constant 5.000000e-01 : f32
    %25 = vector.broadcast %cst_16 : f32 to vector<8x128xf32>
    %26 = arith.mulf %25, %24 : vector<8x128xf32>
    %27 = arith.select %5, %24, %26 : vector<8x128xi1>, vector<8x128xf32>
    %28 = math.tanh %27 : vector<8x128xf32>
    %cst_17 = arith.constant 5.000000e-01 : f32
    %29 = vector.broadcast %cst_17 : f32 to vector<8x128xf32>
    %30 = arith.mulf %29, %28 : vector<8x128xf32>
    %cst_18 = arith.constant 5.000000e-01 : f32
    %31 = vector.broadcast %cst_18 : f32 to vector<8x128xf32>
    %32 = arith.addf %30, %31 : vector<8x128xf32>
    %33 = arith.select %5, %28, %32 : vector<8x128xi1>, vector<8x128xf32>
    %34 = vector.extract_strided_slice %33 {offsets = [0, 0], sizes = [8, 32], strides = [1, 1]} : vector<8x128xf32> to vector<8x32xf32>
    %35 = vector.extract_strided_slice %33 {offsets = [0, 32], sizes = [8, 32], strides = [1, 1]} : vector<8x128xf32> to vector<8x32xf32>
    %36 = vector.extract_strided_slice %33 {offsets = [0, 64], sizes = [8, 32], strides = [1, 1]} : vector<8x128xf32> to vector<8x32xf32>
    %37 = vector.extract_strided_slice %33 {offsets = [0, 96], sizes = [8, 32], strides = [1, 1]} : vector<8x128xf32> to vector<8x32xf32>
    %38 = arith.mulf %35, %18 : vector<8x32xf32>
    %39 = arith.mulf %34, %36 : vector<8x32xf32>
    %40 = arith.addf %38, %39 : vector<8x32xf32>
    %41 = math.tanh %40 : vector<8x32xf32>
    %42 = arith.mulf %37, %41 : vector<8x32xf32>
    %43 = arith.truncf %42 : vector<8x32xf32> to vector<8x32xbf16>
    %cst_19 = arith.constant dense<0.000000e+00> : vector<8x128xf32>
    %44 = tpu.matmul %43, %13, %cst_19 {dimension_numbers = #tpu.dot_dimension_numbers<[1], [0], [0], [1], [0, 0, 1, 1], [], []>} : vector<8x32xbf16>, vector<32x128xbf16>, vector<8x128xf32> -> vector<8x128xf32>
    %45 = arith.addf %44, %20 : vector<8x128xf32>
    %46 = arith.addf %45, %17 : vector<8x128xf32>
    %cst_20 = arith.constant 5.000000e-01 : f32
    %47 = vector.broadcast %cst_20 : f32 to vector<8x128xf32>
    %48 = arith.mulf %47, %46 : vector<8x128xf32>
    %49 = arith.select %5, %46, %48 : vector<8x128xi1>, vector<8x128xf32>
    %50 = math.tanh %49 : vector<8x128xf32>
    %cst_21 = arith.constant 5.000000e-01 : f32
    %51 = vector.broadcast %cst_21 : f32 to vector<8x128xf32>
    %52 = arith.mulf %51, %50 : vector<8x128xf32>
    %cst_22 = arith.constant 5.000000e-01 : f32
    %53 = vector.broadcast %cst_22 : f32 to vector<8x128xf32>
    %54 = arith.addf %52, %53 : vector<8x128xf32>
    %55 = arith.select %5, %50, %54 : vector<8x128xi1>, vector<8x128xf32>
    %56 = vector.extract_strided_slice %55 {offsets = [0, 0], sizes = [8, 32], strides = [1, 1]} : vector<8x128xf32> to vector<8x32xf32>
    %57 = vector.extract_strided_slice %55 {offsets = [0, 32], sizes = [8, 32], strides = [1, 1]} : vector<8x128xf32> to vector<8x32xf32>
    %58 = vector.extract_strided_slice %55 {offsets = [0, 64], sizes = [8, 32], strides = [1, 1]} : vector<8x128xf32> to vector<8x32xf32>
    %59 = vector.extract_strided_slice %55 {offsets = [0, 96], sizes = [8, 32], strides = [1, 1]} : vector<8x128xf32> to vector<8x32xf32>
    %60 = arith.mulf %57, %18 : vector<8x32xf32>
    %61 = arith.mulf %56, %58 : vector<8x32xf32>
    %62 = arith.addf %60, %61 : vector<8x32xf32>
    %63 = math.tanh %62 : vector<8x32xf32>
    %64 = arith.mulf %59, %63 : vector<8x32xf32>
    %65 = arith.truncf %64 : vector<8x32xf32> to vector<8x32xbf16>
    %cst_23 = arith.constant dense<0.000000e+00> : vector<8x128xf32>
    %66 = tpu.matmul %65, %14, %cst_23 {dimension_numbers = #tpu.dot_dimension_numbers<[1], [0], [0], [1], [0, 0, 1, 1], [], []>} : vector<8x32xbf16>, vector<32x128xbf16>, vector<8x128xf32> -> vector<8x128xf32>
    %67 = vector.extract_strided_slice %11 {offsets = [8, 0], sizes = [8, 128], strides = [1, 1]} : vector<64x128xf32> to vector<8x128xf32>
    %68 = arith.truncf %42 : vector<8x32xf32> to vector<8x32xbf16>
    %cst_24 = arith.constant dense<0.000000e+00> : vector<8x128xf32>
    %69 = tpu.matmul %68, %12, %cst_24 {dimension_numbers = #tpu.dot_dimension_numbers<[1], [0], [0], [1], [0, 0, 1, 1], [], []>} : vector<8x32xbf16>, vector<32x128xbf16>, vector<8x128xf32> -> vector<8x128xf32>
    %70 = arith.addf %67, %69 : vector<8x128xf32>
    %cst_25 = arith.constant 5.000000e-01 : f32
    %71 = vector.broadcast %cst_25 : f32 to vector<8x128xf32>
    %72 = arith.mulf %71, %70 : vector<8x128xf32>
    %73 = arith.select %5, %70, %72 : vector<8x128xi1>, vector<8x128xf32>
    %74 = math.tanh %73 : vector<8x128xf32>
    %cst_26 = arith.constant 5.000000e-01 : f32
    %75 = vector.broadcast %cst_26 : f32 to vector<8x128xf32>
    %76 = arith.mulf %75, %74 : vector<8x128xf32>
    %cst_27 = arith.constant 5.000000e-01 : f32
    %77 = vector.broadcast %cst_27 : f32 to vector<8x128xf32>
    %78 = arith.addf %76, %77 : vector<8x128xf32>
    %79 = arith.select %5, %74, %78 : vector<8x128xi1>, vector<8x128xf32>
    %80 = vector.extract_strided_slice %79 {offsets = [0, 0], sizes = [8, 32], strides = [1, 1]} : vector<8x128xf32> to vector<8x32xf32>
    %81 = vector.extract_strided_slice %79 {offsets = [0, 32], sizes = [8, 32], strides = [1, 1]} : vector<8x128xf32> to vector<8x32xf32>
    %82 = vector.extract_strided_slice %79 {offsets = [0, 64], sizes = [8, 32], strides = [1, 1]} : vector<8x128xf32> to vector<8x32xf32>
    %83 = vector.extract_strided_slice %79 {offsets = [0, 96], sizes = [8, 32], strides = [1, 1]} : vector<8x128xf32> to vector<8x32xf32>
    %84 = arith.mulf %81, %40 : vector<8x32xf32>
    %85 = arith.mulf %80, %82 : vector<8x32xf32>
    %86 = arith.addf %84, %85 : vector<8x32xf32>
    %87 = math.tanh %86 : vector<8x32xf32>
    %88 = arith.mulf %83, %87 : vector<8x32xf32>
    %89 = arith.truncf %88 : vector<8x32xf32> to vector<8x32xbf16>
    %cst_28 = arith.constant dense<0.000000e+00> : vector<8x128xf32>
    %90 = tpu.matmul %89, %13, %cst_28 {dimension_numbers = #tpu.dot_dimension_numbers<[1], [0], [0], [1], [0, 0, 1, 1], [], []>} : vector<8x32xbf16>, vector<32x128xbf16>, vector<8x128xf32> -> vector<8x128xf32>
    %91 = arith.addf %90, %66 : vector<8x128xf32>
    %92 = arith.addf %91, %17 : vector<8x128xf32>
    %cst_29 = arith.constant 5.000000e-01 : f32
    %93 = vector.broadcast %cst_29 : f32 to vector<8x128xf32>
    %94 = arith.mulf %93, %92 : vector<8x128xf32>
    %95 = arith.select %5, %92, %94 : vector<8x128xi1>, vector<8x128xf32>
    %96 = math.tanh %95 : vector<8x128xf32>
    %cst_30 = arith.constant 5.000000e-01 : f32
    %97 = vector.broadcast %cst_30 : f32 to vector<8x128xf32>
    %98 = arith.mulf %97, %96 : vector<8x128xf32>
    %cst_31 = arith.constant 5.000000e-01 : f32
    %99 = vector.broadcast %cst_31 : f32 to vector<8x128xf32>
    %100 = arith.addf %98, %99 : vector<8x128xf32>
    %101 = arith.select %5, %96, %100 : vector<8x128xi1>, vector<8x128xf32>
    %102 = vector.extract_strided_slice %101 {offsets = [0, 0], sizes = [8, 32], strides = [1, 1]} : vector<8x128xf32> to vector<8x32xf32>
    %103 = vector.extract_strided_slice %101 {offsets = [0, 32], sizes = [8, 32], strides = [1, 1]} : vector<8x128xf32> to vector<8x32xf32>
    %104 = vector.extract_strided_slice %101 {offsets = [0, 64], sizes = [8, 32], strides = [1, 1]} : vector<8x128xf32> to vector<8x32xf32>
    %105 = vector.extract_strided_slice %101 {offsets = [0, 96], sizes = [8, 32], strides = [1, 1]} : vector<8x128xf32> to vector<8x32xf32>
    %106 = arith.mulf %103, %62 : vector<8x32xf32>
    %107 = arith.mulf %102, %104 : vector<8x32xf32>
    %108 = arith.addf %106, %107 : vector<8x32xf32>
    %109 = math.tanh %108 : vector<8x32xf32>
    %110 = arith.mulf %105, %109 : vector<8x32xf32>
    %111 = arith.truncf %110 : vector<8x32xf32> to vector<8x32xbf16>
    %cst_32 = arith.constant dense<0.000000e+00> : vector<8x128xf32>
    %112 = tpu.matmul %111, %14, %cst_32 {dimension_numbers = #tpu.dot_dimension_numbers<[1], [0], [0], [1], [0, 0, 1, 1], [], []>} : vector<8x32xbf16>, vector<32x128xbf16>, vector<8x128xf32> -> vector<8x128xf32>
    %113 = vector.extract_strided_slice %11 {offsets = [16, 0], sizes = [8, 128], strides = [1, 1]} : vector<64x128xf32> to vector<8x128xf32>
    %114 = arith.truncf %88 : vector<8x32xf32> to vector<8x32xbf16>
    %cst_33 = arith.constant dense<0.000000e+00> : vector<8x128xf32>
    %115 = tpu.matmul %114, %12, %cst_33 {dimension_numbers = #tpu.dot_dimension_numbers<[1], [0], [0], [1], [0, 0, 1, 1], [], []>} : vector<8x32xbf16>, vector<32x128xbf16>, vector<8x128xf32> -> vector<8x128xf32>
    %116 = arith.addf %113, %115 : vector<8x128xf32>
    %cst_34 = arith.constant 5.000000e-01 : f32
    %117 = vector.broadcast %cst_34 : f32 to vector<8x128xf32>
    %118 = arith.mulf %117, %116 : vector<8x128xf32>
    %119 = arith.select %5, %116, %118 : vector<8x128xi1>, vector<8x128xf32>
    %120 = math.tanh %119 : vector<8x128xf32>
    %cst_35 = arith.constant 5.000000e-01 : f32
    %121 = vector.broadcast %cst_35 : f32 to vector<8x128xf32>
    %122 = arith.mulf %121, %120 : vector<8x128xf32>
    %cst_36 = arith.constant 5.000000e-01 : f32
    %123 = vector.broadcast %cst_36 : f32 to vector<8x128xf32>
    %124 = arith.addf %122, %123 : vector<8x128xf32>
    %125 = arith.select %5, %120, %124 : vector<8x128xi1>, vector<8x128xf32>
    %126 = vector.extract_strided_slice %125 {offsets = [0, 0], sizes = [8, 32], strides = [1, 1]} : vector<8x128xf32> to vector<8x32xf32>
    %127 = vector.extract_strided_slice %125 {offsets = [0, 32], sizes = [8, 32], strides = [1, 1]} : vector<8x128xf32> to vector<8x32xf32>
    %128 = vector.extract_strided_slice %125 {offsets = [0, 64], sizes = [8, 32], strides = [1, 1]} : vector<8x128xf32> to vector<8x32xf32>
    %129 = vector.extract_strided_slice %125 {offsets = [0, 96], sizes = [8, 32], strides = [1, 1]} : vector<8x128xf32> to vector<8x32xf32>
    %130 = arith.mulf %127, %86 : vector<8x32xf32>
    %131 = arith.mulf %126, %128 : vector<8x32xf32>
    %132 = arith.addf %130, %131 : vector<8x32xf32>
    %133 = math.tanh %132 : vector<8x32xf32>
    %134 = arith.mulf %129, %133 : vector<8x32xf32>
    %135 = arith.truncf %134 : vector<8x32xf32> to vector<8x32xbf16>
    %cst_37 = arith.constant dense<0.000000e+00> : vector<8x128xf32>
    %136 = tpu.matmul %135, %13, %cst_37 {dimension_numbers = #tpu.dot_dimension_numbers<[1], [0], [0], [1], [0, 0, 1, 1], [], []>} : vector<8x32xbf16>, vector<32x128xbf16>, vector<8x128xf32> -> vector<8x128xf32>
    %137 = arith.addf %136, %112 : vector<8x128xf32>
    %138 = arith.addf %137, %17 : vector<8x128xf32>
    %cst_38 = arith.constant 5.000000e-01 : f32
    %139 = vector.broadcast %cst_38 : f32 to vector<8x128xf32>
    %140 = arith.mulf %139, %138 : vector<8x128xf32>
    %141 = arith.select %5, %138, %140 : vector<8x128xi1>, vector<8x128xf32>
    %142 = math.tanh %141 : vector<8x128xf32>
    %cst_39 = arith.constant 5.000000e-01 : f32
    %143 = vector.broadcast %cst_39 : f32 to vector<8x128xf32>
    %144 = arith.mulf %143, %142 : vector<8x128xf32>
    %cst_40 = arith.constant 5.000000e-01 : f32
    %145 = vector.broadcast %cst_40 : f32 to vector<8x128xf32>
    %146 = arith.addf %144, %145 : vector<8x128xf32>
    %147 = arith.select %5, %142, %146 : vector<8x128xi1>, vector<8x128xf32>
    %148 = vector.extract_strided_slice %147 {offsets = [0, 0], sizes = [8, 32], strides = [1, 1]} : vector<8x128xf32> to vector<8x32xf32>
    %149 = vector.extract_strided_slice %147 {offsets = [0, 32], sizes = [8, 32], strides = [1, 1]} : vector<8x128xf32> to vector<8x32xf32>
    %150 = vector.extract_strided_slice %147 {offsets = [0, 64], sizes = [8, 32], strides = [1, 1]} : vector<8x128xf32> to vector<8x32xf32>
    %151 = vector.extract_strided_slice %147 {offsets = [0, 96], sizes = [8, 32], strides = [1, 1]} : vector<8x128xf32> to vector<8x32xf32>
    %152 = arith.mulf %149, %108 : vector<8x32xf32>
    %153 = arith.mulf %148, %150 : vector<8x32xf32>
    %154 = arith.addf %152, %153 : vector<8x32xf32>
    %155 = math.tanh %154 : vector<8x32xf32>
    %156 = arith.mulf %151, %155 : vector<8x32xf32>
    %157 = arith.truncf %156 : vector<8x32xf32> to vector<8x32xbf16>
    %cst_41 = arith.constant dense<0.000000e+00> : vector<8x128xf32>
    %158 = tpu.matmul %157, %14, %cst_41 {dimension_numbers = #tpu.dot_dimension_numbers<[1], [0], [0], [1], [0, 0, 1, 1], [], []>} : vector<8x32xbf16>, vector<32x128xbf16>, vector<8x128xf32> -> vector<8x128xf32>
    %159 = vector.extract_strided_slice %11 {offsets = [24, 0], sizes = [8, 128], strides = [1, 1]} : vector<64x128xf32> to vector<8x128xf32>
    %160 = arith.truncf %134 : vector<8x32xf32> to vector<8x32xbf16>
    %cst_42 = arith.constant dense<0.000000e+00> : vector<8x128xf32>
    %161 = tpu.matmul %160, %12, %cst_42 {dimension_numbers = #tpu.dot_dimension_numbers<[1], [0], [0], [1], [0, 0, 1, 1], [], []>} : vector<8x32xbf16>, vector<32x128xbf16>, vector<8x128xf32> -> vector<8x128xf32>
    %162 = arith.addf %159, %161 : vector<8x128xf32>
    %cst_43 = arith.constant 5.000000e-01 : f32
    %163 = vector.broadcast %cst_43 : f32 to vector<8x128xf32>
    %164 = arith.mulf %163, %162 : vector<8x128xf32>
    %165 = arith.select %5, %162, %164 : vector<8x128xi1>, vector<8x128xf32>
    %166 = math.tanh %165 : vector<8x128xf32>
    %cst_44 = arith.constant 5.000000e-01 : f32
    %167 = vector.broadcast %cst_44 : f32 to vector<8x128xf32>
    %168 = arith.mulf %167, %166 : vector<8x128xf32>
    %cst_45 = arith.constant 5.000000e-01 : f32
    %169 = vector.broadcast %cst_45 : f32 to vector<8x128xf32>
    %170 = arith.addf %168, %169 : vector<8x128xf32>
    %171 = arith.select %5, %166, %170 : vector<8x128xi1>, vector<8x128xf32>
    %172 = vector.extract_strided_slice %171 {offsets = [0, 0], sizes = [8, 32], strides = [1, 1]} : vector<8x128xf32> to vector<8x32xf32>
    %173 = vector.extract_strided_slice %171 {offsets = [0, 32], sizes = [8, 32], strides = [1, 1]} : vector<8x128xf32> to vector<8x32xf32>
    %174 = vector.extract_strided_slice %171 {offsets = [0, 64], sizes = [8, 32], strides = [1, 1]} : vector<8x128xf32> to vector<8x32xf32>
    %175 = vector.extract_strided_slice %171 {offsets = [0, 96], sizes = [8, 32], strides = [1, 1]} : vector<8x128xf32> to vector<8x32xf32>
    %176 = arith.mulf %173, %132 : vector<8x32xf32>
    %177 = arith.mulf %172, %174 : vector<8x32xf32>
    %178 = arith.addf %176, %177 : vector<8x32xf32>
    %179 = math.tanh %178 : vector<8x32xf32>
    %180 = arith.mulf %175, %179 : vector<8x32xf32>
    %181 = arith.truncf %180 : vector<8x32xf32> to vector<8x32xbf16>
    %cst_46 = arith.constant dense<0.000000e+00> : vector<8x128xf32>
    %182 = tpu.matmul %181, %13, %cst_46 {dimension_numbers = #tpu.dot_dimension_numbers<[1], [0], [0], [1], [0, 0, 1, 1], [], []>} : vector<8x32xbf16>, vector<32x128xbf16>, vector<8x128xf32> -> vector<8x128xf32>
    %183 = arith.addf %182, %158 : vector<8x128xf32>
    %184 = arith.addf %183, %17 : vector<8x128xf32>
    %cst_47 = arith.constant 5.000000e-01 : f32
    %185 = vector.broadcast %cst_47 : f32 to vector<8x128xf32>
    %186 = arith.mulf %185, %184 : vector<8x128xf32>
    %187 = arith.select %5, %184, %186 : vector<8x128xi1>, vector<8x128xf32>
    %188 = math.tanh %187 : vector<8x128xf32>
    %cst_48 = arith.constant 5.000000e-01 : f32
    %189 = vector.broadcast %cst_48 : f32 to vector<8x128xf32>
    %190 = arith.mulf %189, %188 : vector<8x128xf32>
    %cst_49 = arith.constant 5.000000e-01 : f32
    %191 = vector.broadcast %cst_49 : f32 to vector<8x128xf32>
    %192 = arith.addf %190, %191 : vector<8x128xf32>
    %193 = arith.select %5, %188, %192 : vector<8x128xi1>, vector<8x128xf32>
    %194 = vector.extract_strided_slice %193 {offsets = [0, 0], sizes = [8, 32], strides = [1, 1]} : vector<8x128xf32> to vector<8x32xf32>
    %195 = vector.extract_strided_slice %193 {offsets = [0, 32], sizes = [8, 32], strides = [1, 1]} : vector<8x128xf32> to vector<8x32xf32>
    %196 = vector.extract_strided_slice %193 {offsets = [0, 64], sizes = [8, 32], strides = [1, 1]} : vector<8x128xf32> to vector<8x32xf32>
    %197 = vector.extract_strided_slice %193 {offsets = [0, 96], sizes = [8, 32], strides = [1, 1]} : vector<8x128xf32> to vector<8x32xf32>
    %198 = arith.mulf %195, %154 : vector<8x32xf32>
    %199 = arith.mulf %194, %196 : vector<8x32xf32>
    %200 = arith.addf %198, %199 : vector<8x32xf32>
    %201 = math.tanh %200 : vector<8x32xf32>
    %202 = arith.mulf %197, %201 : vector<8x32xf32>
    %203 = arith.truncf %202 : vector<8x32xf32> to vector<8x32xbf16>
    %cst_50 = arith.constant dense<0.000000e+00> : vector<8x128xf32>
    %204 = tpu.matmul %203, %14, %cst_50 {dimension_numbers = #tpu.dot_dimension_numbers<[1], [0], [0], [1], [0, 0, 1, 1], [], []>} : vector<8x32xbf16>, vector<32x128xbf16>, vector<8x128xf32> -> vector<8x128xf32>
    %205 = vector.extract_strided_slice %11 {offsets = [32, 0], sizes = [8, 128], strides = [1, 1]} : vector<64x128xf32> to vector<8x128xf32>
    %206 = arith.truncf %180 : vector<8x32xf32> to vector<8x32xbf16>
    %cst_51 = arith.constant dense<0.000000e+00> : vector<8x128xf32>
    %207 = tpu.matmul %206, %12, %cst_51 {dimension_numbers = #tpu.dot_dimension_numbers<[1], [0], [0], [1], [0, 0, 1, 1], [], []>} : vector<8x32xbf16>, vector<32x128xbf16>, vector<8x128xf32> -> vector<8x128xf32>
    %208 = arith.addf %205, %207 : vector<8x128xf32>
    %cst_52 = arith.constant 5.000000e-01 : f32
    %209 = vector.broadcast %cst_52 : f32 to vector<8x128xf32>
    %210 = arith.mulf %209, %208 : vector<8x128xf32>
    %211 = arith.select %5, %208, %210 : vector<8x128xi1>, vector<8x128xf32>
    %212 = math.tanh %211 : vector<8x128xf32>
    %cst_53 = arith.constant 5.000000e-01 : f32
    %213 = vector.broadcast %cst_53 : f32 to vector<8x128xf32>
    %214 = arith.mulf %213, %212 : vector<8x128xf32>
    %cst_54 = arith.constant 5.000000e-01 : f32
    %215 = vector.broadcast %cst_54 : f32 to vector<8x128xf32>
    %216 = arith.addf %214, %215 : vector<8x128xf32>
    %217 = arith.select %5, %212, %216 : vector<8x128xi1>, vector<8x128xf32>
    %218 = vector.extract_strided_slice %217 {offsets = [0, 0], sizes = [8, 32], strides = [1, 1]} : vector<8x128xf32> to vector<8x32xf32>
    %219 = vector.extract_strided_slice %217 {offsets = [0, 32], sizes = [8, 32], strides = [1, 1]} : vector<8x128xf32> to vector<8x32xf32>
    %220 = vector.extract_strided_slice %217 {offsets = [0, 64], sizes = [8, 32], strides = [1, 1]} : vector<8x128xf32> to vector<8x32xf32>
    %221 = vector.extract_strided_slice %217 {offsets = [0, 96], sizes = [8, 32], strides = [1, 1]} : vector<8x128xf32> to vector<8x32xf32>
    %222 = arith.mulf %219, %178 : vector<8x32xf32>
    %223 = arith.mulf %218, %220 : vector<8x32xf32>
    %224 = arith.addf %222, %223 : vector<8x32xf32>
    %225 = math.tanh %224 : vector<8x32xf32>
    %226 = arith.mulf %221, %225 : vector<8x32xf32>
    %227 = arith.truncf %226 : vector<8x32xf32> to vector<8x32xbf16>
    %cst_55 = arith.constant dense<0.000000e+00> : vector<8x128xf32>
    %228 = tpu.matmul %227, %13, %cst_55 {dimension_numbers = #tpu.dot_dimension_numbers<[1], [0], [0], [1], [0, 0, 1, 1], [], []>} : vector<8x32xbf16>, vector<32x128xbf16>, vector<8x128xf32> -> vector<8x128xf32>
    %229 = arith.addf %228, %204 : vector<8x128xf32>
    %230 = arith.addf %229, %17 : vector<8x128xf32>
    %cst_56 = arith.constant 5.000000e-01 : f32
    %231 = vector.broadcast %cst_56 : f32 to vector<8x128xf32>
    %232 = arith.mulf %231, %230 : vector<8x128xf32>
    %233 = arith.select %5, %230, %232 : vector<8x128xi1>, vector<8x128xf32>
    %234 = math.tanh %233 : vector<8x128xf32>
    %cst_57 = arith.constant 5.000000e-01 : f32
    %235 = vector.broadcast %cst_57 : f32 to vector<8x128xf32>
    %236 = arith.mulf %235, %234 : vector<8x128xf32>
    %cst_58 = arith.constant 5.000000e-01 : f32
    %237 = vector.broadcast %cst_58 : f32 to vector<8x128xf32>
    %238 = arith.addf %236, %237 : vector<8x128xf32>
    %239 = arith.select %5, %234, %238 : vector<8x128xi1>, vector<8x128xf32>
    %240 = vector.extract_strided_slice %239 {offsets = [0, 0], sizes = [8, 32], strides = [1, 1]} : vector<8x128xf32> to vector<8x32xf32>
    %241 = vector.extract_strided_slice %239 {offsets = [0, 32], sizes = [8, 32], strides = [1, 1]} : vector<8x128xf32> to vector<8x32xf32>
    %242 = vector.extract_strided_slice %239 {offsets = [0, 64], sizes = [8, 32], strides = [1, 1]} : vector<8x128xf32> to vector<8x32xf32>
    %243 = vector.extract_strided_slice %239 {offsets = [0, 96], sizes = [8, 32], strides = [1, 1]} : vector<8x128xf32> to vector<8x32xf32>
    %244 = arith.mulf %241, %200 : vector<8x32xf32>
    %245 = arith.mulf %240, %242 : vector<8x32xf32>
    %246 = arith.addf %244, %245 : vector<8x32xf32>
    %247 = math.tanh %246 : vector<8x32xf32>
    %248 = arith.mulf %243, %247 : vector<8x32xf32>
    %249 = arith.truncf %248 : vector<8x32xf32> to vector<8x32xbf16>
    %cst_59 = arith.constant dense<0.000000e+00> : vector<8x128xf32>
    %250 = tpu.matmul %249, %14, %cst_59 {dimension_numbers = #tpu.dot_dimension_numbers<[1], [0], [0], [1], [0, 0, 1, 1], [], []>} : vector<8x32xbf16>, vector<32x128xbf16>, vector<8x128xf32> -> vector<8x128xf32>
    %251 = vector.extract_strided_slice %11 {offsets = [40, 0], sizes = [8, 128], strides = [1, 1]} : vector<64x128xf32> to vector<8x128xf32>
    %252 = arith.truncf %226 : vector<8x32xf32> to vector<8x32xbf16>
    %cst_60 = arith.constant dense<0.000000e+00> : vector<8x128xf32>
    %253 = tpu.matmul %252, %12, %cst_60 {dimension_numbers = #tpu.dot_dimension_numbers<[1], [0], [0], [1], [0, 0, 1, 1], [], []>} : vector<8x32xbf16>, vector<32x128xbf16>, vector<8x128xf32> -> vector<8x128xf32>
    %254 = arith.addf %251, %253 : vector<8x128xf32>
    %cst_61 = arith.constant 5.000000e-01 : f32
    %255 = vector.broadcast %cst_61 : f32 to vector<8x128xf32>
    %256 = arith.mulf %255, %254 : vector<8x128xf32>
    %257 = arith.select %5, %254, %256 : vector<8x128xi1>, vector<8x128xf32>
    %258 = math.tanh %257 : vector<8x128xf32>
    %cst_62 = arith.constant 5.000000e-01 : f32
    %259 = vector.broadcast %cst_62 : f32 to vector<8x128xf32>
    %260 = arith.mulf %259, %258 : vector<8x128xf32>
    %cst_63 = arith.constant 5.000000e-01 : f32
    %261 = vector.broadcast %cst_63 : f32 to vector<8x128xf32>
    %262 = arith.addf %260, %261 : vector<8x128xf32>
    %263 = arith.select %5, %258, %262 : vector<8x128xi1>, vector<8x128xf32>
    %264 = vector.extract_strided_slice %263 {offsets = [0, 0], sizes = [8, 32], strides = [1, 1]} : vector<8x128xf32> to vector<8x32xf32>
    %265 = vector.extract_strided_slice %263 {offsets = [0, 32], sizes = [8, 32], strides = [1, 1]} : vector<8x128xf32> to vector<8x32xf32>
    %266 = vector.extract_strided_slice %263 {offsets = [0, 64], sizes = [8, 32], strides = [1, 1]} : vector<8x128xf32> to vector<8x32xf32>
    %267 = vector.extract_strided_slice %263 {offsets = [0, 96], sizes = [8, 32], strides = [1, 1]} : vector<8x128xf32> to vector<8x32xf32>
    %268 = arith.mulf %265, %224 : vector<8x32xf32>
    %269 = arith.mulf %264, %266 : vector<8x32xf32>
    %270 = arith.addf %268, %269 : vector<8x32xf32>
    %271 = math.tanh %270 : vector<8x32xf32>
    %272 = arith.mulf %267, %271 : vector<8x32xf32>
    %273 = arith.truncf %272 : vector<8x32xf32> to vector<8x32xbf16>
    %cst_64 = arith.constant dense<0.000000e+00> : vector<8x128xf32>
    %274 = tpu.matmul %273, %13, %cst_64 {dimension_numbers = #tpu.dot_dimension_numbers<[1], [0], [0], [1], [0, 0, 1, 1], [], []>} : vector<8x32xbf16>, vector<32x128xbf16>, vector<8x128xf32> -> vector<8x128xf32>
    %275 = arith.addf %274, %250 : vector<8x128xf32>
    %276 = arith.addf %275, %17 : vector<8x128xf32>
    %cst_65 = arith.constant 5.000000e-01 : f32
    %277 = vector.broadcast %cst_65 : f32 to vector<8x128xf32>
    %278 = arith.mulf %277, %276 : vector<8x128xf32>
    %279 = arith.select %5, %276, %278 : vector<8x128xi1>, vector<8x128xf32>
    %280 = math.tanh %279 : vector<8x128xf32>
    %cst_66 = arith.constant 5.000000e-01 : f32
    %281 = vector.broadcast %cst_66 : f32 to vector<8x128xf32>
    %282 = arith.mulf %281, %280 : vector<8x128xf32>
    %cst_67 = arith.constant 5.000000e-01 : f32
    %283 = vector.broadcast %cst_67 : f32 to vector<8x128xf32>
    %284 = arith.addf %282, %283 : vector<8x128xf32>
    %285 = arith.select %5, %280, %284 : vector<8x128xi1>, vector<8x128xf32>
    %286 = vector.extract_strided_slice %285 {offsets = [0, 0], sizes = [8, 32], strides = [1, 1]} : vector<8x128xf32> to vector<8x32xf32>
    %287 = vector.extract_strided_slice %285 {offsets = [0, 32], sizes = [8, 32], strides = [1, 1]} : vector<8x128xf32> to vector<8x32xf32>
    %288 = vector.extract_strided_slice %285 {offsets = [0, 64], sizes = [8, 32], strides = [1, 1]} : vector<8x128xf32> to vector<8x32xf32>
    %289 = vector.extract_strided_slice %285 {offsets = [0, 96], sizes = [8, 32], strides = [1, 1]} : vector<8x128xf32> to vector<8x32xf32>
    %290 = arith.mulf %287, %246 : vector<8x32xf32>
    %291 = arith.mulf %286, %288 : vector<8x32xf32>
    %292 = arith.addf %290, %291 : vector<8x32xf32>
    %293 = math.tanh %292 : vector<8x32xf32>
    %294 = arith.mulf %289, %293 : vector<8x32xf32>
    %295 = arith.truncf %294 : vector<8x32xf32> to vector<8x32xbf16>
    %cst_68 = arith.constant dense<0.000000e+00> : vector<8x128xf32>
    %296 = tpu.matmul %295, %14, %cst_68 {dimension_numbers = #tpu.dot_dimension_numbers<[1], [0], [0], [1], [0, 0, 1, 1], [], []>} : vector<8x32xbf16>, vector<32x128xbf16>, vector<8x128xf32> -> vector<8x128xf32>
    %297 = vector.extract_strided_slice %11 {offsets = [48, 0], sizes = [8, 128], strides = [1, 1]} : vector<64x128xf32> to vector<8x128xf32>
    %298 = arith.truncf %272 : vector<8x32xf32> to vector<8x32xbf16>
    %cst_69 = arith.constant dense<0.000000e+00> : vector<8x128xf32>
    %299 = tpu.matmul %298, %12, %cst_69 {dimension_numbers = #tpu.dot_dimension_numbers<[1], [0], [0], [1], [0, 0, 1, 1], [], []>} : vector<8x32xbf16>, vector<32x128xbf16>, vector<8x128xf32> -> vector<8x128xf32>
    %300 = arith.addf %297, %299 : vector<8x128xf32>
    %cst_70 = arith.constant 5.000000e-01 : f32
    %301 = vector.broadcast %cst_70 : f32 to vector<8x128xf32>
    %302 = arith.mulf %301, %300 : vector<8x128xf32>
    %303 = arith.select %5, %300, %302 : vector<8x128xi1>, vector<8x128xf32>
    %304 = math.tanh %303 : vector<8x128xf32>
    %cst_71 = arith.constant 5.000000e-01 : f32
    %305 = vector.broadcast %cst_71 : f32 to vector<8x128xf32>
    %306 = arith.mulf %305, %304 : vector<8x128xf32>
    %cst_72 = arith.constant 5.000000e-01 : f32
    %307 = vector.broadcast %cst_72 : f32 to vector<8x128xf32>
    %308 = arith.addf %306, %307 : vector<8x128xf32>
    %309 = arith.select %5, %304, %308 : vector<8x128xi1>, vector<8x128xf32>
    %310 = vector.extract_strided_slice %309 {offsets = [0, 0], sizes = [8, 32], strides = [1, 1]} : vector<8x128xf32> to vector<8x32xf32>
    %311 = vector.extract_strided_slice %309 {offsets = [0, 32], sizes = [8, 32], strides = [1, 1]} : vector<8x128xf32> to vector<8x32xf32>
    %312 = vector.extract_strided_slice %309 {offsets = [0, 64], sizes = [8, 32], strides = [1, 1]} : vector<8x128xf32> to vector<8x32xf32>
    %313 = vector.extract_strided_slice %309 {offsets = [0, 96], sizes = [8, 32], strides = [1, 1]} : vector<8x128xf32> to vector<8x32xf32>
    %314 = arith.mulf %311, %270 : vector<8x32xf32>
    %315 = arith.mulf %310, %312 : vector<8x32xf32>
    %316 = arith.addf %314, %315 : vector<8x32xf32>
    %317 = math.tanh %316 : vector<8x32xf32>
    %318 = arith.mulf %313, %317 : vector<8x32xf32>
    %319 = arith.truncf %318 : vector<8x32xf32> to vector<8x32xbf16>
    %cst_73 = arith.constant dense<0.000000e+00> : vector<8x128xf32>
    %320 = tpu.matmul %319, %13, %cst_73 {dimension_numbers = #tpu.dot_dimension_numbers<[1], [0], [0], [1], [0, 0, 1, 1], [], []>} : vector<8x32xbf16>, vector<32x128xbf16>, vector<8x128xf32> -> vector<8x128xf32>
    %321 = arith.addf %320, %296 : vector<8x128xf32>
    %322 = arith.addf %321, %17 : vector<8x128xf32>
    %cst_74 = arith.constant 5.000000e-01 : f32
    %323 = vector.broadcast %cst_74 : f32 to vector<8x128xf32>
    %324 = arith.mulf %323, %322 : vector<8x128xf32>
    %325 = arith.select %5, %322, %324 : vector<8x128xi1>, vector<8x128xf32>
    %326 = math.tanh %325 : vector<8x128xf32>
    %cst_75 = arith.constant 5.000000e-01 : f32
    %327 = vector.broadcast %cst_75 : f32 to vector<8x128xf32>
    %328 = arith.mulf %327, %326 : vector<8x128xf32>
    %cst_76 = arith.constant 5.000000e-01 : f32
    %329 = vector.broadcast %cst_76 : f32 to vector<8x128xf32>
    %330 = arith.addf %328, %329 : vector<8x128xf32>
    %331 = arith.select %5, %326, %330 : vector<8x128xi1>, vector<8x128xf32>
    %332 = vector.extract_strided_slice %331 {offsets = [0, 0], sizes = [8, 32], strides = [1, 1]} : vector<8x128xf32> to vector<8x32xf32>
    %333 = vector.extract_strided_slice %331 {offsets = [0, 32], sizes = [8, 32], strides = [1, 1]} : vector<8x128xf32> to vector<8x32xf32>
    %334 = vector.extract_strided_slice %331 {offsets = [0, 64], sizes = [8, 32], strides = [1, 1]} : vector<8x128xf32> to vector<8x32xf32>
    %335 = vector.extract_strided_slice %331 {offsets = [0, 96], sizes = [8, 32], strides = [1, 1]} : vector<8x128xf32> to vector<8x32xf32>
    %336 = arith.mulf %333, %292 : vector<8x32xf32>
    %337 = arith.mulf %332, %334 : vector<8x32xf32>
    %338 = arith.addf %336, %337 : vector<8x32xf32>
    %339 = math.tanh %338 : vector<8x32xf32>
    %340 = arith.mulf %335, %339 : vector<8x32xf32>
    %341 = arith.truncf %340 : vector<8x32xf32> to vector<8x32xbf16>
    %cst_77 = arith.constant dense<0.000000e+00> : vector<8x128xf32>
    %342 = tpu.matmul %341, %14, %cst_77 {dimension_numbers = #tpu.dot_dimension_numbers<[1], [0], [0], [1], [0, 0, 1, 1], [], []>} : vector<8x32xbf16>, vector<32x128xbf16>, vector<8x128xf32> -> vector<8x128xf32>
    %343 = vector.extract_strided_slice %11 {offsets = [56, 0], sizes = [8, 128], strides = [1, 1]} : vector<64x128xf32> to vector<8x128xf32>
    %344 = arith.truncf %318 : vector<8x32xf32> to vector<8x32xbf16>
    %cst_78 = arith.constant dense<0.000000e+00> : vector<8x128xf32>
    %345 = tpu.matmul %344, %12, %cst_78 {dimension_numbers = #tpu.dot_dimension_numbers<[1], [0], [0], [1], [0, 0, 1, 1], [], []>} : vector<8x32xbf16>, vector<32x128xbf16>, vector<8x128xf32> -> vector<8x128xf32>
    %346 = arith.addf %343, %345 : vector<8x128xf32>
    %cst_79 = arith.constant 5.000000e-01 : f32
    %347 = vector.broadcast %cst_79 : f32 to vector<8x128xf32>
    %348 = arith.mulf %347, %346 : vector<8x128xf32>
    %349 = arith.select %5, %346, %348 : vector<8x128xi1>, vector<8x128xf32>
    %350 = math.tanh %349 : vector<8x128xf32>
    %cst_80 = arith.constant 5.000000e-01 : f32
    %351 = vector.broadcast %cst_80 : f32 to vector<8x128xf32>
    %352 = arith.mulf %351, %350 : vector<8x128xf32>
    %cst_81 = arith.constant 5.000000e-01 : f32
    %353 = vector.broadcast %cst_81 : f32 to vector<8x128xf32>
    %354 = arith.addf %352, %353 : vector<8x128xf32>
    %355 = arith.select %5, %350, %354 : vector<8x128xi1>, vector<8x128xf32>
    %356 = vector.extract_strided_slice %355 {offsets = [0, 0], sizes = [8, 32], strides = [1, 1]} : vector<8x128xf32> to vector<8x32xf32>
    %357 = vector.extract_strided_slice %355 {offsets = [0, 32], sizes = [8, 32], strides = [1, 1]} : vector<8x128xf32> to vector<8x32xf32>
    %358 = vector.extract_strided_slice %355 {offsets = [0, 64], sizes = [8, 32], strides = [1, 1]} : vector<8x128xf32> to vector<8x32xf32>
    %359 = vector.extract_strided_slice %355 {offsets = [0, 96], sizes = [8, 32], strides = [1, 1]} : vector<8x128xf32> to vector<8x32xf32>
    %360 = arith.mulf %357, %316 : vector<8x32xf32>
    %361 = arith.mulf %356, %358 : vector<8x32xf32>
    %362 = arith.addf %360, %361 : vector<8x32xf32>
    %363 = math.tanh %362 : vector<8x32xf32>
    %364 = arith.mulf %359, %363 : vector<8x32xf32>
    %365 = arith.truncf %364 : vector<8x32xf32> to vector<8x32xbf16>
    %cst_82 = arith.constant dense<0.000000e+00> : vector<8x128xf32>
    %366 = tpu.matmul %365, %13, %cst_82 {dimension_numbers = #tpu.dot_dimension_numbers<[1], [0], [0], [1], [0, 0, 1, 1], [], []>} : vector<8x32xbf16>, vector<32x128xbf16>, vector<8x128xf32> -> vector<8x128xf32>
    %367 = arith.addf %366, %342 : vector<8x128xf32>
    %368 = arith.addf %367, %17 : vector<8x128xf32>
    %cst_83 = arith.constant 5.000000e-01 : f32
    %369 = vector.broadcast %cst_83 : f32 to vector<8x128xf32>
    %370 = arith.mulf %369, %368 : vector<8x128xf32>
    %371 = arith.select %5, %368, %370 : vector<8x128xi1>, vector<8x128xf32>
    %372 = math.tanh %371 : vector<8x128xf32>
    %cst_84 = arith.constant 5.000000e-01 : f32
    %373 = vector.broadcast %cst_84 : f32 to vector<8x128xf32>
    %374 = arith.mulf %373, %372 : vector<8x128xf32>
    %cst_85 = arith.constant 5.000000e-01 : f32
    %375 = vector.broadcast %cst_85 : f32 to vector<8x128xf32>
    %376 = arith.addf %374, %375 : vector<8x128xf32>
    %377 = arith.select %5, %372, %376 : vector<8x128xi1>, vector<8x128xf32>
    %378 = vector.extract_strided_slice %377 {offsets = [0, 0], sizes = [8, 32], strides = [1, 1]} : vector<8x128xf32> to vector<8x32xf32>
    %379 = vector.extract_strided_slice %377 {offsets = [0, 32], sizes = [8, 32], strides = [1, 1]} : vector<8x128xf32> to vector<8x32xf32>
    %380 = vector.extract_strided_slice %377 {offsets = [0, 64], sizes = [8, 32], strides = [1, 1]} : vector<8x128xf32> to vector<8x32xf32>
    %381 = vector.extract_strided_slice %377 {offsets = [0, 96], sizes = [8, 32], strides = [1, 1]} : vector<8x128xf32> to vector<8x32xf32>
    %382 = arith.mulf %379, %338 : vector<8x32xf32>
    %383 = arith.mulf %378, %380 : vector<8x32xf32>
    %384 = arith.addf %382, %383 : vector<8x32xf32>
    %385 = math.tanh %384 : vector<8x32xf32>
    %386 = arith.mulf %381, %385 : vector<8x32xf32>
    %387 = arith.truncf %386 : vector<8x32xf32> to vector<8x32xbf16>
    %c0_86 = arith.constant 0 : index
    %c0_87 = arith.constant 0 : index
    %388 = vector.load %arg7[%c0_86, %c0_87] : memref<32x128xbf16, #tpu.memory_space<vmem>>, vector<32x128xbf16>
    %cst_88 = arith.constant dense<0.000000e+00> : vector<8x128xf32>
    %389 = tpu.matmul %387, %388, %cst_88 {dimension_numbers = #tpu.dot_dimension_numbers<[1], [0], [0], [1], [0, 0, 1, 1], [], []>} : vector<8x32xbf16>, vector<32x128xbf16>, vector<8x128xf32> -> vector<8x128xf32>
    %c0_89 = arith.constant 0 : index
    %c0_90 = arith.constant 0 : index
    %390 = vector.load %arg8[%c0_89, %c0_90] : memref<1x128xf32, #tpu.memory_space<vmem>>, vector<1x128xf32>
    %391 = vector.broadcast %390 : vector<1x128xf32> to vector<8x128xf32>
    %392 = arith.addf %389, %391 : vector<8x128xf32>
    %cst_91 = arith.constant 0.000000e+00 : f32
    %393 = vector.broadcast %cst_91 : f32 to vector<8x128xf32>
    %394 = arith.cmpf oge, %392, %393 : vector<8x128xf32>
    %cst_92 = arith.constant 2.000000e-01 : f32
    %395 = vector.broadcast %cst_92 : f32 to vector<8x128xf32>
    %396 = arith.mulf %395, %392 : vector<8x128xf32>
    %397 = arith.select %394, %392, %396 : vector<8x128xi1>, vector<8x128xf32>
    %398 = arith.truncf %397 : vector<8x128xf32> to vector<8x128xbf16>
    %c0_93 = arith.constant 0 : index
    %c0_94 = arith.constant 0 : index
    %399 = vector.load %arg9[%c0_93, %c0_94] : memref<128x128xbf16, #tpu.memory_space<vmem>>, vector<128x128xbf16>
    %cst_95 = arith.constant dense<0.000000e+00> : vector<8x128xf32>
    %400 = tpu.matmul %398, %399, %cst_95 {dimension_numbers = #tpu.dot_dimension_numbers<[1], [0], [0], [1], [0, 0, 1, 1], [], []>} : vector<8x128xbf16>, vector<128x128xbf16>, vector<8x128xf32> -> vector<8x128xf32>
    %c0_96 = arith.constant 0 : index
    %c0_97 = arith.constant 0 : index
    %401 = vector.load %arg10[%c0_96, %c0_97] : memref<1x128xf32, #tpu.memory_space<vmem>>, vector<1x128xf32>
    %402 = vector.broadcast %401 : vector<1x128xf32> to vector<8x128xf32>
    %403 = arith.addf %400, %402 : vector<8x128xf32>
    %c0_98 = arith.constant 0 : index
    %c0_99 = arith.constant 0 : index
    %404 = vector.load %arg11[%c0_98, %c0_99] : memref<8x128xf32, #tpu.memory_space<vmem>>, vector<8x128xf32>
    tpu.vector_store %arg11[%c0_98, %c0_99], %403 {strides = array<i32>} : memref<8x128xf32, #tpu.memory_space<vmem>>, vector<8x128xf32>,
    return
  }
}

</mosaic_0001>

<llo_original>
// kernel: lstm_forward.1
$region0: #{lstm_forward.1}
  #allocation0 [shape = 'u32[]', space=smem, size = 0x4, offset = 0x4, fixed_abs, tag = 'smem constant byte address 0x4 - core index']
  #allocation1 [shape = 'u32[144,128]{1,0:T(1,128)}', space=vmem, size = 0x12000, scoped, tag = 'internal scratch']
  %s0 = inlined_call_operand.vmem [shape: bf16[64,32], index: 0, kind: input, shape index: {}]
  %s1 = inlined_call_operand.vmem [shape: bf16[32,128], index: 1, kind: input, shape index: {}]
  %s2 = inlined_call_operand.hbm [shape: bf16[32,128], index: 2, kind: input, shape index: {}]
  %s3 = inlined_call_operand.hbm [shape: f32[1,128], index: 3, kind: input, shape index: {}]
  %s4 = inlined_call_operand.hbm [shape: bf16[32,128], index: 4, kind: input, shape index: {}]
  %s5 = inlined_call_operand.hbm [shape: bf16[32,128], index: 5, kind: input, shape index: {}]
  %s6 = inlined_call_operand.hbm [shape: f32[1,128], index: 6, kind: input, shape index: {}]
  %s7 = inlined_call_operand.hbm [shape: bf16[32,128], index: 7, kind: input, shape index: {}]
  %s8 = inlined_call_operand.hbm [shape: f32[1,128], index: 8, kind: input, shape index: {}]
  %s9 = inlined_call_operand.vmem [shape: bf16[128,128], index: 9, kind: input, shape index: {}]
  %s10 = inlined_call_operand.vmem [shape: f32[1,128], index: 10, kind: input, shape index: {}]
  %s11 = inlined_call_operand.vmem [shape: f32[8,128], index: 11, kind: output, shape index: {}]
  %s12 = sld [smem:[#allocation0]]
  $region82: #{lstm_forward.1} parent=0
    _
  %s14 = ssub.s32 1, %s12
  %s15 = scalar_select 0, %s14, %s12
  $region1: #{lstm_forward.1} parent=0
    #allocation2 [shape = 'u8[8192]{0}', space=vmem, size = 0x2000, scoped, tag = 'input window, operand 2, single buffered']
    #allocation3 [shape = 's32[1]{0}', space=sflag, size = 0x4, scoped, tag = 'scoped memory for lstm_forward.1']
    #allocation4 [shape = 'u8[512]{0}', space=vmem, size = 0x400, scoped, tag = 'input window, operand 3, single buffered']
    #allocation5 [shape = 's32[1]{0}', space=sflag, size = 0x4, scoped, tag = 'scoped memory for lstm_forward.1']
    #allocation6 [shape = 'u8[8192]{0}', space=vmem, size = 0x2000, scoped, tag = 'input window, operand 4, single buffered']
    #allocation7 [shape = 'u8[8192]{0}', space=vmem, size = 0x2000, scoped, tag = 'input window, operand 5, single buffered']
    #allocation8 [shape = 's32[1]{0}', space=sflag, size = 0x4, scoped, tag = 'scoped memory for lstm_forward.1']
    #allocation9 [shape = 'u8[512]{0}', space=vmem, size = 0x400, scoped, tag = 'input window, operand 6, single buffered']
    #allocation10 [shape = 'u8[8192]{0}', space=vmem, size = 0x2000, scoped, tag = 'input window, operand 7, single buffered']
    #allocation11 [shape = 's32[1]{0}', space=sflag, size = 0x4, scoped, tag = 'scoped memory for lstm_forward.1']
    #allocation12 [shape = 'u8[512]{0}', space=vmem, size = 0x400, scoped, tag = 'input window, operand 8, single buffered']
    %16 = vsyncpa [#allocation3], 0
    %17 = vsyncpa [#allocation5], 0
    %18 = vsyncpa [#allocation8], 0
    %19 = vsyncpa [#allocation11], 0
    // Predicated region
    $region2: #{lstm_forward.1} parent=1 // pred_check
      _
    $region3: #{lstm_forward.1} parent=1 // pred_check_branch
      %21 = sbr.rel (0) target = $region5
    $region4: #{lstm_forward.1} parent=1 // pred_region
      _
    $region5: #{lstm_forward.1} parent=1 // pred_fallthru
      _
    // Predicated region
    $region6: #{lstm_forward.1} parent=1 // pred_check
      _
    $region7: #{lstm_forward.1} parent=1 // pred_check_branch
      %23 = sbr.rel (0) target = $region9
    $region8: #{lstm_forward.1} parent=1 // pred_region
      _
    $region9: #{lstm_forward.1} parent=1 // pred_fallthru
      _
    // Predicated region
    $region10: #{lstm_forward.1} parent=1 // pred_check
      _
    $region11: #{lstm_forward.1} parent=1 // pred_check_branch
      %25 = sbr.rel (0) target = $region13
    $region12: #{lstm_forward.1} parent=1 // pred_region
      %s27 = ssub.s32 256, 256
      %28 = vsyncadd [#allocation3], %s27
      %s29 = sshll.u32 [#allocation2], 4
      %s30 = int_to_ptr.vmem [resolvable:$true] %s29
      %35 = dma.hbm_to_vmem [thread:$0]  %s2, 256, %s30, [#allocation3], 64, 64, 4
    $region13: #{lstm_forward.1} parent=1 // pred_fallthru
      _
    // Predicated region
    $region14: #{lstm_forward.1} parent=1 // pred_check
      _
    $region15: #{lstm_forward.1} parent=1 // pred_check_branch
      %37 = sbr.rel (0) target = $region17
    $region16: #{lstm_forward.1} parent=1 // pred_region
      %s39 = ssub.s32 16, 16
      %40 = vsyncadd [#allocation5], %s39
      %s42 = sshll.u32 [#allocation4], 4
      %s43 = int_to_ptr.vmem [resolvable:$true] %s42
      %45 = dma.hbm_to_vmem [thread:$0]  %s3, 16, %s43, [#allocation5]
    $region17: #{lstm_forward.1} parent=1 // pred_fallthru
      _
    // Predicated region
    $region18: #{lstm_forward.1} parent=1 // pred_check
      _
    $region19: #{lstm_forward.1} parent=1 // pred_check_branch
      %47 = sbr.rel (0) target = $region21
    $region20: #{lstm_forward.1} parent=1 // pred_region
      %s49 = ssub.s32 256, 256
      %50 = vsyncadd [#allocation5], %s49
      %s51 = sshll.u32 [#allocation6], 4
      %s52 = int_to_ptr.vmem [resolvable:$true] %s51
      %57 = dma.hbm_to_vmem [thread:$0]  %s4, 256, %s52, [#allocation5], 64, 64, 4
    $region21: #{lstm_forward.1} parent=1 // pred_fallthru
      _
    // Predicated region
    $region22: #{lstm_forward.1} parent=1 // pred_check
      _
    $region23: #{lstm_forward.1} parent=1 // pred_check_branch
      %59 = sbr.rel (0) target = $region25
    $region24: #{lstm_forward.1} parent=1 // pred_region
      %s61 = ssub.s32 256, 256
      %62 = vsyncadd [#allocation8], %s61
      %s63 = sshll.u32 [#allocation7], 4
      %s64 = int_to_ptr.vmem [resolvable:$true] %s63
      %69 = dma.hbm_to_vmem [thread:$0]  %s5, 256, %s64, [#allocation8], 64, 64, 4
    $region25: #{lstm_forward.1} parent=1 // pred_fallthru
      _
    // Predicated region
    $region26: #{lstm_forward.1} parent=1 // pred_check
      _
    $region27: #{lstm_forward.1} parent=1 // pred_check_branch
      %71 = sbr.rel (0) target = $region29
    $region28: #{lstm_forward.1} parent=1 // pred_region
      %s73 = ssub.s32 16, 16
      %74 = vsyncadd [#allocation8], %s73
      %s76 = sshll.u32 [#allocation9], 4
      %s77 = int_to_ptr.vmem [resolvable:$true] %s76
      %79 = dma.hbm_to_vmem [thread:$0]  %s6, 16, %s77, [#allocation8]
    $region29: #{lstm_forward.1} parent=1 // pred_fallthru
      _
    // Predicated region
    $region30: #{lstm_forward.1} parent=1 // pred_check
      _
    $region31: #{lstm_forward.1} parent=1 // pred_check_branch
      %81 = sbr.rel (0) target = $region33
    $region32: #{lstm_forward.1} parent=1 // pred_region
      %s83 = ssub.s32 256, 256
      %84 = vsyncadd [#allocation11], %s83
      %s85 = sshll.u32 [#allocation10], 4
      %s86 = int_to_ptr.vmem [resolvable:$true] %s85
      %91 = dma.hbm_to_vmem [thread:$0]  %s7, 256, %s86, [#allocation11], 64, 64, 4
    $region33: #{lstm_forward.1} parent=1 // pred_fallthru
      _
    // Predicated region
    $region34: #{lstm_forward.1} parent=1 // pred_check
      _
    $region35: #{lstm_forward.1} parent=1 // pred_check_branch
      %93 = sbr.rel (0) target = $region37
    $region36: #{lstm_forward.1} parent=1 // pred_region
      %s95 = ssub.s32 16, 16
      %96 = vsyncadd [#allocation11], %s95
      %s98 = sshll.u32 [#allocation12], 4
      %s99 = int_to_ptr.vmem [resolvable:$true] %s98
      %101 = dma.hbm_to_vmem [thread:$0]  %s8, 16, %s99, [#allocation11]
    $region37: #{lstm_forward.1} parent=1 // pred_fallthru
      _
    // Predicated region
    $region38: #{lstm_forward.1} parent=1 // pred_check
      _
    $region39: #{lstm_forward.1} parent=1 // pred_check_branch
      %103 = sbr.rel (0) target = $region41
    $region40: #{lstm_forward.1} parent=1 // pred_region
      _
    $region41: #{lstm_forward.1} parent=1 // pred_fallthru
      _
    // Predicated region
    $region42: #{lstm_forward.1} parent=1 // pred_check
      _
    $region43: #{lstm_forward.1} parent=1 // pred_check_branch
      %105 = sbr.rel (0) target = $region45
    $region44: #{lstm_forward.1} parent=1 // pred_region
      _
    $region45: #{lstm_forward.1} parent=1 // pred_fallthru
      _
    // Predicated region
    $region46: #{lstm_forward.1} parent=1 // pred_check
      _
    $region47: #{lstm_forward.1} parent=1 // pred_check_branch
      %107 = sbr.rel (0) target = $region49
    $region48: #{lstm_forward.1} parent=1 // pred_region
      %108 = dma.done [#allocation3], 256
    $region49: #{lstm_forward.1} parent=1 // pred_fallthru
      _
    // Predicated region
    $region50: #{lstm_forward.1} parent=1 // pred_check
      _
    $region51: #{lstm_forward.1} parent=1 // pred_check_branch
      %110 = sbr.rel (0) target = $region53
    $region52: #{lstm_forward.1} parent=1 // pred_region
      %111 = dma.done [#allocation5], 16
    $region53: #{lstm_forward.1} parent=1 // pred_fallthru
      _
    // Predicated region
    $region54: #{lstm_forward.1} parent=1 // pred_check
      _
    $region55: #{lstm_forward.1} parent=1 // pred_check_branch
      %113 = sbr.rel (0) target = $region57
    $region56: #{lstm_forward.1} parent=1 // pred_region
      %114 = dma.done [#allocation5], 256
    $region57: #{lstm_forward.1} parent=1 // pred_fallthru
      _
    // Predicated region
    $region58: #{lstm_forward.1} parent=1 // pred_check
      _
    $region59: #{lstm_forward.1} parent=1 // pred_check_branch
      %116 = sbr.rel (0) target = $region61
    $region60: #{lstm_forward.1} parent=1 // pred_region
      %117 = dma.done [#allocation8], 256
    $region61: #{lstm_forward.1} parent=1 // pred_fallthru
      _
    // Predicated region
    $region62: #{lstm_forward.1} parent=1 // pred_check
      _
    $region63: #{lstm_forward.1} parent=1 // pred_check_branch
      %119 = sbr.rel (0) target = $region65
    $region64: #{lstm_forward.1} parent=1 // pred_region
      %120 = dma.done [#allocation8], 16
    $region65: #{lstm_forward.1} parent=1 // pred_fallthru
      _
    // Predicated region
    $region66: #{lstm_forward.1} parent=1 // pred_check
      _
    $region67: #{lstm_forward.1} parent=1 // pred_check_branch
      %122 = sbr.rel (0) target = $region69
    $region68: #{lstm_forward.1} parent=1 // pred_region
      %123 = dma.done [#allocation11], 256
    $region69: #{lstm_forward.1} parent=1 // pred_fallthru
      _
    // Predicated region
    $region70: #{lstm_forward.1} parent=1 // pred_check
      _
    $region71: #{lstm_forward.1} parent=1 // pred_check_branch
      %125 = sbr.rel (0) target = $region73
    $region72: #{lstm_forward.1} parent=1 // pred_region
      %126 = dma.done [#allocation11], 16
    $region73: #{lstm_forward.1} parent=1 // pred_fallthru
      _
    %v128 = vlaneseq
    %v129 = vand.u32 %v128, 127
    %vm130 = vcmp.ge.s32.totalorder %v129, 64
    %vm131 = vcmp.lt.s32.totalorder %v129, 96
    %vm132 = vmand %vm130, %vm131
    %v133 = vld [vmem:[%s0] sm:$0xf]
    %v134 = vld [vmem:[%s0 + $0x4] sm:$0xf]
    %v135 = vld [vmem:[%s0 + $0x8] sm:$0xf]
    %v136 = vld [vmem:[%s0 + $0xc] sm:$0xf]
    %v137 = vld [vmem:[%s0 + $0x10] sm:$0xf]
    %v138 = vld [vmem:[%s0 + $0x14] sm:$0xf]
    %v139 = vld [vmem:[%s0 + $0x18] sm:$0xf]
    %v140 = vld [vmem:[%s0 + $0x1c] sm:$0xf]
    %v141 = vld [vmem:[%s1] sm:$0xf]
    %v142 = vld [vmem:[%s1 + $0x4] sm:$0xf]
    %v143 = vld [vmem:[%s1 + $0x8] sm:$0xf]
    %v144 = vld [vmem:[%s1 + $0xc] sm:$0xf]
    %v145 = vld [vmem:[#allocation4] sm:$0x1]
    %v147 = vlaneseq
    %v148 = vshrl.u32 %v147, 7
    %v149 = vsub.s32 0, %v148
    %v150 = vrot.slane %v145, %v149
    %v160 = vunpack.c.l.b16 %v133
    %v161 = vunpack.c.l.b16 %v134
    %v162 = vunpack.c.l.b16 %v135
    %v163 = vunpack.c.l.b16 %v136
    %v164 = vunpack.c.l.b16 %v137
    %v165 = vunpack.c.l.b16 %v138
    %v166 = vunpack.c.l.b16 %v139
    %v167 = vunpack.c.l.b16 %v140
    %v168 = vpack.c.b16 %v161, %v160
    %v169 = vpack.c.b16 %v163, %v162
    %v170 = vpack.c.b16 %v165, %v164
    %v171 = vpack.c.b16 %v167, %v166
    %v176 = vunpack.c.l.b16 %v141
    %v177 = vunpack.c.l.b16 %v142
    %v178 = vunpack.c.l.b16 %v143
    %v179 = vunpack.c.l.b16 %v144
    %v180 = vpack.c.b16 %v177, %v176
    %v181 = vpack.c.b16 %v179, %v178
    %vm184 = vcmask 261120
    %v186 = vsel %vm184, %v168, 0
    %v189 = vsel %vm184, %v169, 0
    %v192 = vsel %vm184, %v170, 0
    %v195 = vsel %vm184, %v171, 0
    %197 = vmatprep.subr.bf16.mxu0 0
    %198 = vmatpush1.bf16.msra.mxu0 0
    %199 = vmatprep.subr.bf16.mxu0 0
    %200 = vmatpush1.bf16.msra.mxu0 0
    %201 = vmatprep.subr.bf16.mxu0 0
    %202 = vmatpush1.bf16.msra.mxu0 0
    %203 = vmatprep.subr.bf16.mxu0 0
    %204 = vmatpush1.bf16.msra.mxu0 0
    %205 = vmatprep.subr.bf16.mxu0 0
    %206 = vmatpush1.bf16.msra.mxu0 0
    %207 = vmatprep.subr.bf16.mxu0 0
    %208 = vmatpush1.bf16.msra.mxu0 0
    %209 = vmatprep.subr.bf16.mxu0 0
    %210 = vmatpush1.bf16.msra.mxu0 %v181
    %211 = vmatprep.subr.bf16.mxu0 0
    %212 = vmatpush1.bf16.msra.mxu0 %v180
    %213 = vmatprep.subr.bf16.mxu0 0
    %214 = vmatpush2.bf16.msra.mxu0 0
    %215 = vmatprep.subr.bf16.mxu0 0
    %216 = vmatpush2.bf16.msra.mxu0 0
    %217 = vmatprep.subr.bf16.mxu0 0
    %218 = vmatpush2.bf16.msra.mxu0 0
    %219 = vmatprep.subr.bf16.mxu0 0
    %220 = vmatpush2.bf16.msra.mxu0 0
    %221 = vmatprep.subr.bf16.mxu0 0
    %222 = vmatpush2.bf16.msra.mxu0 0
    %223 = vmatprep.subr.bf16.mxu0 0
    %224 = vmatpush2.bf16.msra.mxu0 0
    %225 = vmatprep.subr.bf16.mxu0 0
    %226 = vmatpush2.bf16.msra.mxu0 0
    %227 = vmatprep.subr.bf16.mxu0 0
    %228 = vmatpush2.bf16.msra.mxu0 0
    %229 = vmatprep.mubr.bf16.mxu0 0
    %230 = vmatmul.mubr.bf16.gmra.mxu0 %v186
    %v231 = vpop.f32.mrf.mxu0
    %v232 = vadd.f32 %v150, %v231
    %v233 = vpop.f32.mrf.mxu0
    %v234 = vpop.f32.mrf.mxu0
    %v235 = vadd.f32 %v150, %v234
    %v236 = vpop.f32.mrf.mxu0
    %237 = vmatprep.mubr.bf16.mxu0 0
    %238 = vmatmul.mubr.bf16.gmra.mxu0 %v189
    %v239 = vpop.f32.mrf.mxu0
    %v240 = vadd.f32 %v150, %v239
    %v241 = vpop.f32.mrf.mxu0
    %v242 = vpop.f32.mrf.mxu0
    %v243 = vadd.f32 %v150, %v242
    %v244 = vpop.f32.mrf.mxu0
    %245 = vmatprep.mubr.bf16.mxu0 0
    %246 = vmatmul.mubr.bf16.gmra.mxu0 %v192
    %v247 = vpop.f32.mrf.mxu0
    %v248 = vadd.f32 %v150, %v247
    %v249 = vpop.f32.mrf.mxu0
    %v250 = vpop.f32.mrf.mxu0
    %v251 = vadd.f32 %v150, %v250
    %v252 = vpop.f32.mrf.mxu0
    %253 = vmatprep.mubr.bf16.mxu0 0
    %254 = vmatmul.mubr.bf16.gmra.mxu0 %v195
    %v255 = vpop.f32.mrf.mxu0
    %v256 = vadd.f32 %v150, %v255
    %v257 = vpop.f32.mrf.mxu0
    %v258 = vpop.f32.mrf.mxu0
    %v259 = vadd.f32 %v150, %v258
    %v260 = vpop.f32.mrf.mxu0
    %261 = vdwg.mxu0
    %v262 = vld [vmem:[#allocation2] sm:$0xf]
    %v263 = vld [vmem:[#allocation2 + $0x4] sm:$0xf]
    %v264 = vld [vmem:[#allocation2 + $0x8] sm:$0xf]
    %v265 = vld [vmem:[#allocation2 + $0xc] sm:$0xf]
    %v266 = vld [vmem:[#allocation6] sm:$0xf]
    %v267 = vld [vmem:[#allocation6 + $0x4] sm:$0xf]
    %v268 = vld [vmem:[#allocation6 + $0x8] sm:$0xf]
    %v269 = vld [vmem:[#allocation6 + $0xc] sm:$0xf]
    %v270 = vld [vmem:[#allocation7] sm:$0xf]
    %v271 = vld [vmem:[#allocation7 + $0x4] sm:$0xf]
    %v272 = vld [vmem:[#allocation7 + $0x8] sm:$0xf]
    %v273 = vld [vmem:[#allocation7 + $0xc] sm:$0xf]
    %v274 = vld [vmem:[#allocation9] sm:$0x1]
    %v276 = vlaneseq
    %v277 = vshrl.u32 %v276, 7
    %v278 = vsub.s32 0, %v277
    %v279 = vrot.slane %v274, %v278
    %v285 = vunpack.c.l.b16 %v270
    %v286 = vunpack.c.l.b16 %v271
    %v287 = vunpack.c.l.b16 %v272
    %v288 = vunpack.c.l.b16 %v273
    %v289 = vpack.c.b16 %v286, %v285
    %v290 = vpack.c.b16 %v288, %v287
    %v294 = vsel %vm184, 0, 0
    %296 = vmatprep.subr.bf16.mxu0 0
    %297 = vmatpush1.bf16.msra.mxu0 0
    %298 = vmatprep.subr.bf16.mxu0 0
    %299 = vmatpush1.bf16.msra.mxu0 0
    %300 = vmatprep.subr.bf16.mxu0 0
    %301 = vmatpush1.bf16.msra.mxu0 0
    %302 = vmatprep.subr.bf16.mxu0 0
    %303 = vmatpush1.bf16.msra.mxu0 0
    %304 = vmatprep.subr.bf16.mxu0 0
    %305 = vmatpush1.bf16.msra.mxu0 0
    %306 = vmatprep.subr.bf16.mxu0 0
    %307 = vmatpush1.bf16.msra.mxu0 0
    %308 = vmatprep.subr.bf16.mxu0 0
    %309 = vmatpush1.bf16.msra.mxu0 %v290
    %310 = vmatprep.subr.bf16.mxu0 0
    %311 = vmatpush1.bf16.msra.mxu0 %v289
    %312 = vmatprep.subr.bf16.mxu0 0
    %313 = vmatpush2.bf16.msra.mxu0 0
    %314 = vmatprep.subr.bf16.mxu0 0
    %315 = vmatpush2.bf16.msra.mxu0 0
    %316 = vmatprep.subr.bf16.mxu0 0
    %317 = vmatpush2.bf16.msra.mxu0 0
    %318 = vmatprep.subr.bf16.mxu0 0
    %319 = vmatpush2.bf16.msra.mxu0 0
    %320 = vmatprep.subr.bf16.mxu0 0
    %321 = vmatpush2.bf16.msra.mxu0 0
    %322 = vmatprep.subr.bf16.mxu0 0
    %323 = vmatpush2.bf16.msra.mxu0 0
    %324 = vmatprep.subr.bf16.mxu0 0
    %325 = vmatpush2.bf16.msra.mxu0 0
    %326 = vmatprep.subr.bf16.mxu0 0
    %327 = vmatpush2.bf16.msra.mxu0 0
    %328 = vmatprep.mubr.bf16.mxu0 0
    %329 = vmatmul.mubr.bf16.gmra.mxu0 %v294
    %v330 = vpop.f32.mrf.mxu0
    %v331 = vadd.f32 0.0, %v330
    %v332 = vpop.f32.mrf.mxu0
    %v333 = vpop.f32.mrf.mxu0
    %v334 = vpop.f32.mrf.mxu0
    %335 = vdwg.mxu0
    %v340 = vunpack.c.l.b16 %v262
    %v341 = vunpack.c.l.b16 %v263
    %v342 = vunpack.c.l.b16 %v264
    %v343 = vunpack.c.l.b16 %v265
    %v344 = vpack.c.b16 %v341, %v340
    %v345 = vpack.c.b16 %v343, %v342
    %348 = vmatprep.subr.bf16.mxu0 0
    %349 = vmatpush1.bf16.msra.mxu0 0
    %350 = vmatprep.subr.bf16.mxu0 0
    %351 = vmatpush1.bf16.msra.mxu0 0
    %352 = vmatprep.subr.bf16.mxu0 0
    %353 = vmatpush1.bf16.msra.mxu0 0
    %354 = vmatprep.subr.bf16.mxu0 0
    %355 = vmatpush1.bf16.msra.mxu0 0
    %356 = vmatprep.subr.bf16.mxu0 0
    %357 = vmatpush1.bf16.msra.mxu0 0
    %358 = vmatprep.subr.bf16.mxu0 0
    %359 = vmatpush1.bf16.msra.mxu0 0
    %360 = vmatprep.subr.bf16.mxu0 0
    %361 = vmatpush1.bf16.msra.mxu0 %v345
    %362 = vmatprep.subr.bf16.mxu0 0
    %363 = vmatpush1.bf16.msra.mxu0 %v344
    %364 = vmatprep.subr.bf16.mxu0 0
    %365 = vmatpush2.bf16.msra.mxu0 0
    %366 = vmatprep.subr.bf16.mxu0 0
    %367 = vmatpush2.bf16.msra.mxu0 0
    %368 = vmatprep.subr.bf16.mxu0 0
    %369 = vmatpush2.bf16.msra.mxu0 0
    %370 = vmatprep.subr.bf16.mxu0 0
    %371 = vmatpush2.bf16.msra.mxu0 0
    %372 = vmatprep.subr.bf16.mxu0 0
    %373 = vmatpush2.bf16.msra.mxu0 0
    %374 = vmatprep.subr.bf16.mxu0 0
    %375 = vmatpush2.bf16.msra.mxu0 0
    %376 = vmatprep.subr.bf16.mxu0 0
    %377 = vmatpush2.bf16.msra.mxu0 0
    %378 = vmatprep.subr.bf16.mxu0 0
    %379 = vmatpush2.bf16.msra.mxu0 0
    %380 = vmatprep.mubr.bf16.mxu0 0
    %381 = vmatmul.mubr.bf16.gmra.mxu0 %v294
    %v382 = vpop.f32.mrf.mxu0
    %v383 = vadd.f32 0.0, %v382
    %v384 = vpop.f32.mrf.mxu0
    %v385 = vpop.f32.mrf.mxu0
    %v386 = vpop.f32.mrf.mxu0
    %387 = vdwg.mxu0
    %v388 = vadd.f32 %v232, %v383
    %v389 = vmul.f32 %v388, 0.5
    %v390 = vsel %vm132, %v388, %v389
    %v391 = vtanh.pop %v390
    %v392 = vmul.f32 %v391, 0.5
    %v393 = vadd.f32 %v392, 0.5
    %v394 = vsel %vm132, %v391, %v393
    %v395 = vmul.f32 %v394, 0.0
    %397 = vrot.lane.b32.xlu0 %v394, 64
    %v398 = vpop.permute.xlu0 %397
    %v400 = vmul.f32 %v394, %v398
    %402 = vrot.lane.b32.xlu0 %v400, 32
    %v403 = vpop.permute.xlu0 %402
    %v405 = vadd.f32 %v395, %v403
    %v406 = vtanh.pop %v405
    %408 = vrot.lane.b32.xlu0 %v406, 64
    %v409 = vpop.permute.xlu0 %408
    %v411 = vmul.f32 %v394, %v409
    %v412 = vpack.c.bf16 %v411, %v411
    %414 = vrot.lane.b32.xlu0 %v412, 32
    %v415 = vpop.permute.xlu0 %414
    %v420 = vunpack.c.l.b16 %v266
    %v421 = vunpack.c.l.b16 %v267
    %v422 = vunpack.c.l.b16 %v268
    %v423 = vunpack.c.l.b16 %v269
    %v424 = vpack.c.b16 %v421, %v420
    %v425 = vpack.c.b16 %v423, %v422
    %v429 = vsel %vm184, %v415, 0
    %431 = vmatprep.subr.bf16.mxu0 0
    %432 = vmatpush1.bf16.msra.mxu0 0
    %433 = vmatprep.subr.bf16.mxu0 0
    %434 = vmatpush1.bf16.msra.mxu0 0
    %435 = vmatprep.subr.bf16.mxu0 0
    %436 = vmatpush1.bf16.msra.mxu0 0
    %437 = vmatprep.subr.bf16.mxu0 0
    %438 = vmatpush1.bf16.msra.mxu0 0
    %439 = vmatprep.subr.bf16.mxu0 0
    %440 = vmatpush1.bf16.msra.mxu0 0
    %441 = vmatprep.subr.bf16.mxu0 0
    %442 = vmatpush1.bf16.msra.mxu0 0
    %443 = vmatprep.subr.bf16.mxu0 0
    %444 = vmatpush1.bf16.msra.mxu0 %v425
    %445 = vmatprep.subr.bf16.mxu0 0
    %446 = vmatpush1.bf16.msra.mxu0 %v424
    %447 = vmatprep.subr.bf16.mxu0 0
    %448 = vmatpush2.bf16.msra.mxu0 0
    %449 = vmatprep.subr.bf16.mxu0 0
    %450 = vmatpush2.bf16.msra.mxu0 0
    %451 = vmatprep.subr.bf16.mxu0 0
    %452 = vmatpush2.bf16.msra.mxu0 0
    %453 = vmatprep.subr.bf16.mxu0 0
    %454 = vmatpush2.bf16.msra.mxu0 0
    %455 = vmatprep.subr.bf16.mxu0 0
    %456 = vmatpush2.bf16.msra.mxu0 0
    %457 = vmatprep.subr.bf16.mxu0 0
    %458 = vmatpush2.bf16.msra.mxu0 0
    %459 = vmatprep.subr.bf16.mxu0 0
    %460 = vmatpush2.bf16.msra.mxu0 0
    %461 = vmatprep.subr.bf16.mxu0 0
    %462 = vmatpush2.bf16.msra.mxu0 0
    %463 = vmatprep.mubr.bf16.mxu0 0
    %464 = vmatmul.mubr.bf16.gmra.mxu0 %v429
    %v465 = vpop.f32.mrf.mxu0
    %v466 = vadd.f32 %v331, %v465
    %v467 = vpop.f32.mrf.mxu0
    %v468 = vpop.f32.mrf.mxu0
    %v469 = vpop.f32.mrf.mxu0
    %470 = vdwg.mxu0
    %v471 = vadd.f32 %v466, %v279
    %v472 = vmul.f32 %v471, 0.5
    %v473 = vsel %vm132, %v471, %v472
    %v474 = vtanh.pop %v473
    %v475 = vmul.f32 %v474, 0.5
    %v476 = vadd.f32 %v475, 0.5
    %v477 = vsel %vm132, %v474, %v476
    %v478 = vmul.f32 %v477, 0.0
    %480 = vrot.lane.b32.xlu0 %v477, 64
    %v481 = vpop.permute.xlu0 %480
    %v483 = vmul.f32 %v477, %v481
    %485 = vrot.lane.b32.xlu0 %v483, 32
    %v486 = vpop.permute.xlu0 %485
    %v488 = vadd.f32 %v478, %v486
    %v489 = vtanh.pop %v488
    %491 = vrot.lane.b32.xlu0 %v489, 64
    %v492 = vpop.permute.xlu0 %491
    %v494 = vmul.f32 %v477, %v492
    %v495 = vpack.c.bf16 %v494, %v494
    %497 = vrot.lane.b32.xlu0 %v495, 32
    %v498 = vpop.permute.xlu0 %497
    %v500 = vsel %vm184, %v498, 0
    %502 = vmatprep.subr.bf16.mxu0 0
    %503 = vmatpush1.bf16.msra.mxu0 0
    %504 = vmatprep.subr.bf16.mxu0 0
    %505 = vmatpush1.bf16.msra.mxu0 0
    %506 = vmatprep.subr.bf16.mxu0 0
    %507 = vmatpush1.bf16.msra.mxu0 0
    %508 = vmatprep.subr.bf16.mxu0 0
    %509 = vmatpush1.bf16.msra.mxu0 0
    %510 = vmatprep.subr.bf16.mxu0 0
    %511 = vmatpush1.bf16.msra.mxu0 0
    %512 = vmatprep.subr.bf16.mxu0 0
    %513 = vmatpush1.bf16.msra.mxu0 0
    %514 = vmatprep.subr.bf16.mxu0 0
    %515 = vmatpush1.bf16.msra.mxu0 %v290
    %516 = vmatprep.subr.bf16.mxu0 0
    %517 = vmatpush1.bf16.msra.mxu0 %v289
    %518 = vmatprep.subr.bf16.mxu0 0
    %519 = vmatpush2.bf16.msra.mxu0 0
    %520 = vmatprep.subr.bf16.mxu0 0
    %521 = vmatpush2.bf16.msra.mxu0 0
    %522 = vmatprep.subr.bf16.mxu0 0
    %523 = vmatpush2.bf16.msra.mxu0 0
    %524 = vmatprep.subr.bf16.mxu0 0
    %525 = vmatpush2.bf16.msra.mxu0 0
    %526 = vmatprep.subr.bf16.mxu0 0
    %527 = vmatpush2.bf16.msra.mxu0 0
    %528 = vmatprep.subr.bf16.mxu0 0
    %529 = vmatpush2.bf16.msra.mxu0 0
    %530 = vmatprep.subr.bf16.mxu0 0
    %531 = vmatpush2.bf16.msra.mxu0 0
    %532 = vmatprep.subr.bf16.mxu0 0
    %533 = vmatpush2.bf16.msra.mxu0 0
    %534 = vmatprep.mubr.bf16.mxu0 0
    %535 = vmatmul.mubr.bf16.gmra.mxu0 %v500
    %v536 = vpop.f32.mrf.mxu0
    %v537 = vadd.f32 0.0, %v536
    %v538 = vpop.f32.mrf.mxu0
    %v539 = vpop.f32.mrf.mxu0
    %v540 = vpop.f32.mrf.mxu0
    %541 = vdwg.mxu0
    %542 = vmatprep.subr.bf16.mxu0 0
    %543 = vmatpush1.bf16.msra.mxu0 0
    %544 = vmatprep.subr.bf16.mxu0 0
    %545 = vmatpush1.bf16.msra.mxu0 0
    %546 = vmatprep.subr.bf16.mxu0 0
    %547 = vmatpush1.bf16.msra.mxu0 0
    %548 = vmatprep.subr.bf16.mxu0 0
    %549 = vmatpush1.bf16.msra.mxu0 0
    %550 = vmatprep.subr.bf16.mxu0 0
    %551 = vmatpush1.bf16.msra.mxu0 0
    %552 = vmatprep.subr.bf16.mxu0 0
    %553 = vmatpush1.bf16.msra.mxu0 0
    %554 = vmatprep.subr.bf16.mxu0 0
    %555 = vmatpush1.bf16.msra.mxu0 %v345
    %556 = vmatprep.subr.bf16.mxu0 0
    %557 = vmatpush1.bf16.msra.mxu0 %v344
    %558 = vmatprep.subr.bf16.mxu0 0
    %559 = vmatpush2.bf16.msra.mxu0 0
    %560 = vmatprep.subr.bf16.mxu0 0
    %561 = vmatpush2.bf16.msra.mxu0 0
    %562 = vmatprep.subr.bf16.mxu0 0
    %563 = vmatpush2.bf16.msra.mxu0 0
    %564 = vmatprep.subr.bf16.mxu0 0
    %565 = vmatpush2.bf16.msra.mxu0 0
    %566 = vmatprep.subr.bf16.mxu0 0
    %567 = vmatpush2.bf16.msra.mxu0 0
    %568 = vmatprep.subr.bf16.mxu0 0
    %569 = vmatpush2.bf16.msra.mxu0 0
    %570 = vmatprep.subr.bf16.mxu0 0
    %571 = vmatpush2.bf16.msra.mxu0 0
    %572 = vmatprep.subr.bf16.mxu0 0
    %573 = vmatpush2.bf16.msra.mxu0 0
    %574 = vmatprep.mubr.bf16.mxu0 0
    %575 = vmatmul.mubr.bf16.gmra.mxu0 %v429
    %v576 = vpop.f32.mrf.mxu0
    %v577 = vadd.f32 0.0, %v576
    %v578 = vpop.f32.mrf.mxu0
    %v579 = vpop.f32.mrf.mxu0
    %v580 = vpop.f32.mrf.mxu0
    %581 = vdwg.mxu0
    %v582 = vadd.f32 %v235, %v577
    %v583 = vmul.f32 %v582, 0.5
    %v584 = vsel %vm132, %v582, %v583
    %v585 = vtanh.pop %v584
    %v586 = vmul.f32 %v585, 0.5
    %v587 = vadd.f32 %v586, 0.5
    %v588 = vsel %vm132, %v585, %v587
    %v589 = vmul.f32 %v588, %v405
    %591 = vrot.lane.b32.xlu0 %v588, 64
    %v592 = vpop.permute.xlu0 %591
    %v594 = vmul.f32 %v588, %v592
    %596 = vrot.lane.b32.xlu0 %v594, 32
    %v597 = vpop.permute.xlu0 %596
    %v599 = vadd.f32 %v589, %v597
    %v600 = vtanh.pop %v599
    %602 = vrot.lane.b32.xlu0 %v600, 64
    %v603 = vpop.permute.xlu0 %602
    %v605 = vmul.f32 %v588, %v603
    %v606 = vpack.c.bf16 %v605, %v605
    %608 = vrot.lane.b32.xlu0 %v606, 32
    %v609 = vpop.permute.xlu0 %608
    %v611 = vsel %vm184, %v609, 0
    %613 = vmatprep.subr.bf16.mxu0 0
    %614 = vmatpush1.bf16.msra.mxu0 0
    %615 = vmatprep.subr.bf16.mxu0 0
    %616 = vmatpush1.bf16.msra.mxu0 0
    %617 = vmatprep.subr.bf16.mxu0 0
    %618 = vmatpush1.bf16.msra.mxu0 0
    %619 = vmatprep.subr.bf16.mxu0 0
    %620 = vmatpush1.bf16.msra.mxu0 0
    %621 = vmatprep.subr.bf16.mxu0 0
    %622 = vmatpush1.bf16.msra.mxu0 0
    %623 = vmatprep.subr.bf16.mxu0 0
    %624 = vmatpush1.bf16.msra.mxu0 0
    %625 = vmatprep.subr.bf16.mxu0 0
    %626 = vmatpush1.bf16.msra.mxu0 %v425
    %627 = vmatprep.subr.bf16.mxu0 0
    %628 = vmatpush1.bf16.msra.mxu0 %v424
    %629 = vmatprep.subr.bf16.mxu0 0
    %630 = vmatpush2.bf16.msra.mxu0 0
    %631 = vmatprep.subr.bf16.mxu0 0
    %632 = vmatpush2.bf16.msra.mxu0 0
    %633 = vmatprep.subr.bf16.mxu0 0
    %634 = vmatpush2.bf16.msra.mxu0 0
    %635 = vmatprep.subr.bf16.mxu0 0
    %636 = vmatpush2.bf16.msra.mxu0 0
    %637 = vmatprep.subr.bf16.mxu0 0
    %638 = vmatpush2.bf16.msra.mxu0 0
    %639 = vmatprep.subr.bf16.mxu0 0
    %640 = vmatpush2.bf16.msra.mxu0 0
    %641 = vmatprep.subr.bf16.mxu0 0
    %642 = vmatpush2.bf16.msra.mxu0 0
    %643 = vmatprep.subr.bf16.mxu0 0
    %644 = vmatpush2.bf16.msra.mxu0 0
    %645 = vmatprep.mubr.bf16.mxu0 0
    %646 = vmatmul.mubr.bf16.gmra.mxu0 %v611
    %v647 = vpop.f32.mrf.mxu0
    %v648 = vadd.f32 %v537, %v647
    %v649 = vpop.f32.mrf.mxu0
    %v650 = vpop.f32.mrf.mxu0
    %v651 = vpop.f32.mrf.mxu0
    %652 = vdwg.mxu0
    %v653 = vadd.f32 %v648, %v279
    %v654 = vmul.f32 %v653, 0.5
    %v655 = vsel %vm132, %v653, %v654
    %v656 = vtanh.pop %v655
    %v657 = vmul.f32 %v656, 0.5
    %v658 = vadd.f32 %v657, 0.5
    %v659 = vsel %vm132, %v656, %v658
    %v660 = vmul.f32 %v659, %v488
    %662 = vrot.lane.b32.xlu0 %v659, 64
    %v663 = vpop.permute.xlu0 %662
    %v665 = vmul.f32 %v659, %v663
    %667 = vrot.lane.b32.xlu0 %v665, 32
    %v668 = vpop.permute.xlu0 %667
    %v670 = vadd.f32 %v660, %v668
    %v671 = vtanh.pop %v670
    %673 = vrot.lane.b32.xlu0 %v671, 64
    %v674 = vpop.permute.xlu0 %673
    %v676 = vmul.f32 %v659, %v674
    %v677 = vpack.c.bf16 %v676, %v676
    %679 = vrot.lane.b32.xlu0 %v677, 32
    %v680 = vpop.permute.xlu0 %679
    %v682 = vsel %vm184, %v680, 0
    %684 = vmatprep.subr.bf16.mxu0 0
    %685 = vmatpush1.bf16.msra.mxu0 0
    %686 = vmatprep.subr.bf16.mxu0 0
    %687 = vmatpush1.bf16.msra.mxu0 0
    %688 = vmatprep.subr.bf16.mxu0 0
    %689 = vmatpush1.bf16.msra.mxu0 0
    %690 = vmatprep.subr.bf16.mxu0 0
    %691 = vmatpush1.bf16.msra.mxu0 0
    %692 = vmatprep.subr.bf16.mxu0 0
    %693 = vmatpush1.bf16.msra.mxu0 0
    %694 = vmatprep.subr.bf16.mxu0 0
    %695 = vmatpush1.bf16.msra.mxu0 0
    %696 = vmatprep.subr.bf16.mxu0 0
    %697 = vmatpush1.bf16.msra.mxu0 %v290
    %698 = vmatprep.subr.bf16.mxu0 0
    %699 = vmatpush1.bf16.msra.mxu0 %v289
    %700 = vmatprep.subr.bf16.mxu0 0
    %701 = vmatpush2.bf16.msra.mxu0 0
    %702 = vmatprep.subr.bf16.mxu0 0
    %703 = vmatpush2.bf16.msra.mxu0 0
    %704 = vmatprep.subr.bf16.mxu0 0
    %705 = vmatpush2.bf16.msra.mxu0 0
    %706 = vmatprep.subr.bf16.mxu0 0
    %707 = vmatpush2.bf16.msra.mxu0 0
    %708 = vmatprep.subr.bf16.mxu0 0
    %709 = vmatpush2.bf16.msra.mxu0 0
    %710 = vmatprep.subr.bf16.mxu0 0
    %711 = vmatpush2.bf16.msra.mxu0 0
    %712 = vmatprep.subr.bf16.mxu0 0
    %713 = vmatpush2.bf16.msra.mxu0 0
    %714 = vmatprep.subr.bf16.mxu0 0
    %715 = vmatpush2.bf16.msra.mxu0 0
    %716 = vmatprep.mubr.bf16.mxu0 0
    %717 = vmatmul.mubr.bf16.gmra.mxu0 %v682
    %v718 = vpop.f32.mrf.mxu0
    %v719 = vadd.f32 0.0, %v718
    %v720 = vpop.f32.mrf.mxu0
    %v721 = vpop.f32.mrf.mxu0
    %v722 = vpop.f32.mrf.mxu0
    %723 = vdwg.mxu0
    %724 = vmatprep.subr.bf16.mxu0 0
    %725 = vmatpush1.bf16.msra.mxu0 0
    %726 = vmatprep.subr.bf16.mxu0 0
    %727 = vmatpush1.bf16.msra.mxu0 0
    %728 = vmatprep.subr.bf16.mxu0 0
    %729 = vmatpush1.bf16.msra.mxu0 0
    %730 = vmatprep.subr.bf16.mxu0 0
    %731 = vmatpush1.bf16.msra.mxu0 0
    %732 = vmatprep.subr.bf16.mxu0 0
    %733 = vmatpush1.bf16.msra.mxu0 0
    %734 = vmatprep.subr.bf16.mxu0 0
    %735 = vmatpush1.bf16.msra.mxu0 0
    %736 = vmatprep.subr.bf16.mxu0 0
    %737 = vmatpush1.bf16.msra.mxu0 %v345
    %738 = vmatprep.subr.bf16.mxu0 0
    %739 = vmatpush1.bf16.msra.mxu0 %v344
    %740 = vmatprep.subr.bf16.mxu0 0
    %741 = vmatpush2.bf16.msra.mxu0 0
    %742 = vmatprep.subr.bf16.mxu0 0
    %743 = vmatpush2.bf16.msra.mxu0 0
    %744 = vmatprep.subr.bf16.mxu0 0
    %745 = vmatpush2.bf16.msra.mxu0 0
    %746 = vmatprep.subr.bf16.mxu0 0
    %747 = vmatpush2.bf16.msra.mxu0 0
    %748 = vmatprep.subr.bf16.mxu0 0
    %749 = vmatpush2.bf16.msra.mxu0 0
    %750 = vmatprep.subr.bf16.mxu0 0
    %751 = vmatpush2.bf16.msra.mxu0 0
    %752 = vmatprep.subr.bf16.mxu0 0
    %753 = vmatpush2.bf16.msra.mxu0 0
    %754 = vmatprep.subr.bf16.mxu0 0
    %755 = vmatpush2.bf16.msra.mxu0 0
    %756 = vmatprep.mubr.bf16.mxu0 0
    %757 = vmatmul.mubr.bf16.gmra.mxu0 %v611
    %v758 = vpop.f32.mrf.mxu0
    %v759 = vadd.f32 0.0, %v758
    %v760 = vpop.f32.mrf.mxu0
    %v761 = vpop.f32.mrf.mxu0
    %v762 = vpop.f32.mrf.mxu0
    %763 = vdwg.mxu0
    %v764 = vadd.f32 %v240, %v759
    %v765 = vmul.f32 %v764, 0.5
    %v766 = vsel %vm132, %v764, %v765
    %v767 = vtanh.pop %v766
    %v768 = vmul.f32 %v767, 0.5
    %v769 = vadd.f32 %v768, 0.5
    %v770 = vsel %vm132, %v767, %v769
    %v771 = vmul.f32 %v770, %v599
    %773 = vrot.lane.b32.xlu0 %v770, 64
    %v774 = vpop.permute.xlu0 %773
    %v776 = vmul.f32 %v770, %v774
    %778 = vrot.lane.b32.xlu0 %v776, 32
    %v779 = vpop.permute.xlu0 %778
    %v781 = vadd.f32 %v771, %v779
    %v782 = vtanh.pop %v781
    %784 = vrot.lane.b32.xlu0 %v782, 64
    %v785 = vpop.permute.xlu0 %784
    %v787 = vmul.f32 %v770, %v785
    %v788 = vpack.c.bf16 %v787, %v787
    %790 = vrot.lane.b32.xlu0 %v788, 32
    %v791 = vpop.permute.xlu0 %790
    %v793 = vsel %vm184, %v791, 0
    %795 = vmatprep.subr.bf16.mxu0 0
    %796 = vmatpush1.bf16.msra.mxu0 0
    %797 = vmatprep.subr.bf16.mxu0 0
    %798 = vmatpush1.bf16.msra.mxu0 0
    %799 = vmatprep.subr.bf16.mxu0 0
    %800 = vmatpush1.bf16.msra.mxu0 0
    %801 = vmatprep.subr.bf16.mxu0 0
    %802 = vmatpush1.bf16.msra.mxu0 0
    %803 = vmatprep.subr.bf16.mxu0 0
    %804 = vmatpush1.bf16.msra.mxu0 0
    %805 = vmatprep.subr.bf16.mxu0 0
    %806 = vmatpush1.bf16.msra.mxu0 0
    %807 = vmatprep.subr.bf16.mxu0 0
    %808 = vmatpush1.bf16.msra.mxu0 %v425
    %809 = vmatprep.subr.bf16.mxu0 0
    %810 = vmatpush1.bf16.msra.mxu0 %v424
    %811 = vmatprep.subr.bf16.mxu0 0
    %812 = vmatpush2.bf16.msra.mxu0 0
    %813 = vmatprep.subr.bf16.mxu0 0
    %814 = vmatpush2.bf16.msra.mxu0 0
    %815 = vmatprep.subr.bf16.mxu0 0
    %816 = vmatpush2.bf16.msra.mxu0 0
    %817 = vmatprep.subr.bf16.mxu0 0
    %818 = vmatpush2.bf16.msra.mxu0 0
    %819 = vmatprep.subr.bf16.mxu0 0
    %820 = vmatpush2.bf16.msra.mxu0 0
    %821 = vmatprep.subr.bf16.mxu0 0
    %822 = vmatpush2.bf16.msra.mxu0 0
    %823 = vmatprep.subr.bf16.mxu0 0
    %824 = vmatpush2.bf16.msra.mxu0 0
    %825 = vmatprep.subr.bf16.mxu0 0
    %826 = vmatpush2.bf16.msra.mxu0 0
    %827 = vmatprep.mubr.bf16.mxu0 0
    %828 = vmatmul.mubr.bf16.gmra.mxu0 %v793
    %v829 = vpop.f32.mrf.mxu0
    %v830 = vadd.f32 %v719, %v829
    %v831 = vpop.f32.mrf.mxu0
    %v832 = vpop.f32.mrf.mxu0
    %v833 = vpop.f32.mrf.mxu0
    %834 = vdwg.mxu0
    %v835 = vadd.f32 %v830, %v279
    %v836 = vmul.f32 %v835, 0.5
    %v837 = vsel %vm132, %v835, %v836
    %v838 = vtanh.pop %v837
    %v839 = vmul.f32 %v838, 0.5
    %v840 = vadd.f32 %v839, 0.5
    %v841 = vsel %vm132, %v838, %v840
    %v842 = vmul.f32 %v841, %v670
    %844 = vrot.lane.b32.xlu0 %v841, 64
    %v845 = vpop.permute.xlu0 %844
    %v847 = vmul.f32 %v841, %v845
    %849 = vrot.lane.b32.xlu0 %v847, 32
    %v850 = vpop.permute.xlu0 %849
    %v852 = vadd.f32 %v842, %v850
    %v853 = vtanh.pop %v852
    %855 = vrot.lane.b32.xlu0 %v853, 64
    %v856 = vpop.permute.xlu0 %855
    %v858 = vmul.f32 %v841, %v856
    %v859 = vpack.c.bf16 %v858, %v858
    %861 = vrot.lane.b32.xlu0 %v859, 32
    %v862 = vpop.permute.xlu0 %861
    %v864 = vsel %vm184, %v862, 0
    %866 = vmatprep.subr.bf16.mxu0 0
    %867 = vmatpush1.bf16.msra.mxu0 0
    %868 = vmatprep.subr.bf16.mxu0 0
    %869 = vmatpush1.bf16.msra.mxu0 0
    %870 = vmatprep.subr.bf16.mxu0 0
    %871 = vmatpush1.bf16.msra.mxu0 0
    %872 = vmatprep.subr.bf16.mxu0 0
    %873 = vmatpush1.bf16.msra.mxu0 0
    %874 = vmatprep.subr.bf16.mxu0 0
    %875 = vmatpush1.bf16.msra.mxu0 0
    %876 = vmatprep.subr.bf16.mxu0 0
    %877 = vmatpush1.bf16.msra.mxu0 0
    %878 = vmatprep.subr.bf16.mxu0 0
    %879 = vmatpush1.bf16.msra.mxu0 %v290
    %880 = vmatprep.subr.bf16.mxu0 0
    %881 = vmatpush1.bf16.msra.mxu0 %v289
    %882 = vmatprep.subr.bf16.mxu0 0
    %883 = vmatpush2.bf16.msra.mxu0 0
    %884 = vmatprep.subr.bf16.mxu0 0
    %885 = vmatpush2.bf16.msra.mxu0 0
    %886 = vmatprep.subr.bf16.mxu0 0
    %887 = vmatpush2.bf16.msra.mxu0 0
    %888 = vmatprep.subr.bf16.mxu0 0
    %889 = vmatpush2.bf16.msra.mxu0 0
    %890 = vmatprep.subr.bf16.mxu0 0
    %891 = vmatpush2.bf16.msra.mxu0 0
    %892 = vmatprep.subr.bf16.mxu0 0
    %893 = vmatpush2.bf16.msra.mxu0 0
    %894 = vmatprep.subr.bf16.mxu0 0
    %895 = vmatpush2.bf16.msra.mxu0 0
    %896 = vmatprep.subr.bf16.mxu0 0
    %897 = vmatpush2.bf16.msra.mxu0 0
    %898 = vmatprep.mubr.bf16.mxu0 0
    %899 = vmatmul.mubr.bf16.gmra.mxu0 %v864
    %v900 = vpop.f32.mrf.mxu0
    %v901 = vadd.f32 0.0, %v900
    %v902 = vpop.f32.mrf.mxu0
    %v903 = vpop.f32.mrf.mxu0
    %v904 = vpop.f32.mrf.mxu0
    %905 = vdwg.mxu0
    %906 = vmatprep.subr.bf16.mxu0 0
    %907 = vmatpush1.bf16.msra.mxu0 0
    %908 = vmatprep.subr.bf16.mxu0 0
    %909 = vmatpush1.bf16.msra.mxu0 0
    %910 = vmatprep.subr.bf16.mxu0 0
    %911 = vmatpush1.bf16.msra.mxu0 0
    %912 = vmatprep.subr.bf16.mxu0 0
    %913 = vmatpush1.bf16.msra.mxu0 0
    %914 = vmatprep.subr.bf16.mxu0 0
    %915 = vmatpush1.bf16.msra.mxu0 0
    %916 = vmatprep.subr.bf16.mxu0 0
    %917 = vmatpush1.bf16.msra.mxu0 0
    %918 = vmatprep.subr.bf16.mxu0 0
    %919 = vmatpush1.bf16.msra.mxu0 %v345
    %920 = vmatprep.subr.bf16.mxu0 0
    %921 = vmatpush1.bf16.msra.mxu0 %v344
    %922 = vmatprep.subr.bf16.mxu0 0
    %923 = vmatpush2.bf16.msra.mxu0 0
    %924 = vmatprep.subr.bf16.mxu0 0
    %925 = vmatpush2.bf16.msra.mxu0 0
    %926 = vmatprep.subr.bf16.mxu0 0
    %927 = vmatpush2.bf16.msra.mxu0 0
    %928 = vmatprep.subr.bf16.mxu0 0
    %929 = vmatpush2.bf16.msra.mxu0 0
    %930 = vmatprep.subr.bf16.mxu0 0
    %931 = vmatpush2.bf16.msra.mxu0 0
    %932 = vmatprep.subr.bf16.mxu0 0
    %933 = vmatpush2.bf16.msra.mxu0 0
    %934 = vmatprep.subr.bf16.mxu0 0
    %935 = vmatpush2.bf16.msra.mxu0 0
    %936 = vmatprep.subr.bf16.mxu0 0
    %937 = vmatpush2.bf16.msra.mxu0 0
    %938 = vmatprep.mubr.bf16.mxu0 0
    %939 = vmatmul.mubr.bf16.gmra.mxu0 %v793
    %v940 = vpop.f32.mrf.mxu0
    %v941 = vadd.f32 0.0, %v940
    %v942 = vpop.f32.mrf.mxu0
    %v943 = vpop.f32.mrf.mxu0
    %v944 = vpop.f32.mrf.mxu0
    %945 = vdwg.mxu0
    %v946 = vadd.f32 %v243, %v941
    %v947 = vmul.f32 %v946, 0.5
    %v948 = vsel %vm132, %v946, %v947
    %v949 = vtanh.pop %v948
    %v950 = vmul.f32 %v949, 0.5
    %v951 = vadd.f32 %v950, 0.5
    %v952 = vsel %vm132, %v949, %v951
    %v953 = vmul.f32 %v952, %v781
    %955 = vrot.lane.b32.xlu0 %v952, 64
    %v956 = vpop.permute.xlu0 %955
    %v958 = vmul.f32 %v952, %v956
    %960 = vrot.lane.b32.xlu0 %v958, 32
    %v961 = vpop.permute.xlu0 %960
    %v963 = vadd.f32 %v953, %v961
    %v964 = vtanh.pop %v963
    %966 = vrot.lane.b32.xlu0 %v964, 64
    %v967 = vpop.permute.xlu0 %966
    %v969 = vmul.f32 %v952, %v967
    %v970 = vpack.c.bf16 %v969, %v969
    %972 = vrot.lane.b32.xlu0 %v970, 32
    %v973 = vpop.permute.xlu0 %972
    %v975 = vsel %vm184, %v973, 0
    %977 = vmatprep.subr.bf16.mxu0 0
    %978 = vmatpush1.bf16.msra.mxu0 0
    %979 = vmatprep.subr.bf16.mxu0 0
    %980 = vmatpush1.bf16.msra.mxu0 0
    %981 = vmatprep.subr.bf16.mxu0 0
    %982 = vmatpush1.bf16.msra.mxu0 0
    %983 = vmatprep.subr.bf16.mxu0 0
    %984 = vmatpush1.bf16.msra.mxu0 0
    %985 = vmatprep.subr.bf16.mxu0 0
    %986 = vmatpush1.bf16.msra.mxu0 0
    %987 = vmatprep.subr.bf16.mxu0 0
    %988 = vmatpush1.bf16.msra.mxu0 0
    %989 = vmatprep.subr.bf16.mxu0 0
    %990 = vmatpush1.bf16.msra.mxu0 %v425
    %991 = vmatprep.subr.bf16.mxu0 0
    %992 = vmatpush1.bf16.msra.mxu0 %v424
    %993 = vmatprep.subr.bf16.mxu0 0
    %994 = vmatpush2.bf16.msra.mxu0 0
    %995 = vmatprep.subr.bf16.mxu0 0
    %996 = vmatpush2.bf16.msra.mxu0 0
    %997 = vmatprep.subr.bf16.mxu0 0
    %998 = vmatpush2.bf16.msra.mxu0 0
    %999 = vmatprep.subr.bf16.mxu0 0
    %1000 = vmatpush2.bf16.msra.mxu0 0
    %1001 = vmatprep.subr.bf16.mxu0 0
    %1002 = vmatpush2.bf16.msra.mxu0 0
    %1003 = vmatprep.subr.bf16.mxu0 0
    %1004 = vmatpush2.bf16.msra.mxu0 0
    %1005 = vmatprep.subr.bf16.mxu0 0
    %1006 = vmatpush2.bf16.msra.mxu0 0
    %1007 = vmatprep.subr.bf16.mxu0 0
    %1008 = vmatpush2.bf16.msra.mxu0 0
    %1009 = vmatprep.mubr.bf16.mxu0 0
    %1010 = vmatmul.mubr.bf16.gmra.mxu0 %v975
    %v1011 = vpop.f32.mrf.mxu0
    %v1012 = vadd.f32 %v901, %v1011
    %v1013 = vpop.f32.mrf.mxu0
    %v1014 = vpop.f32.mrf.mxu0
    %v1015 = vpop.f32.mrf.mxu0
    %1016 = vdwg.mxu0
    %v1017 = vadd.f32 %v1012, %v279
    %v1018 = vmul.f32 %v1017, 0.5
    %v1019 = vsel %vm132, %v1017, %v1018
    %v1020 = vtanh.pop %v1019
    %v1021 = vmul.f32 %v1020, 0.5
    %v1022 = vadd.f32 %v1021, 0.5
    %v1023 = vsel %vm132, %v1020, %v1022
    %v1024 = vmul.f32 %v1023, %v852
    %1026 = vrot.lane.b32.xlu0 %v1023, 64
    %v1027 = vpop.permute.xlu0 %1026
    %v1029 = vmul.f32 %v1023, %v1027
    %1031 = vrot.lane.b32.xlu0 %v1029, 32
    %v1032 = vpop.permute.xlu0 %1031
    %v1034 = vadd.f32 %v1024, %v1032
    %v1035 = vtanh.pop %v1034
    %1037 = vrot.lane.b32.xlu0 %v1035, 64
    %v1038 = vpop.permute.xlu0 %1037
    %v1040 = vmul.f32 %v1023, %v1038
    %v1041 = vpack.c.bf16 %v1040, %v1040
    %1043 = vrot.lane.b32.xlu0 %v1041, 32
    %v1044 = vpop.permute.xlu0 %1043
    %v1046 = vsel %vm184, %v1044, 0
    %1048 = vmatprep.subr.bf16.mxu0 0
    %1049 = vmatpush1.bf16.msra.mxu0 0
    %1050 = vmatprep.subr.bf16.mxu0 0
    %1051 = vmatpush1.bf16.msra.mxu0 0
    %1052 = vmatprep.subr.bf16.mxu0 0
    %1053 = vmatpush1.bf16.msra.mxu0 0
    %1054 = vmatprep.subr.bf16.mxu0 0
    %1055 = vmatpush1.bf16.msra.mxu0 0
    %1056 = vmatprep.subr.bf16.mxu0 0
    %1057 = vmatpush1.bf16.msra.mxu0 0
    %1058 = vmatprep.subr.bf16.mxu0 0
    %1059 = vmatpush1.bf16.msra.mxu0 0
    %1060 = vmatprep.subr.bf16.mxu0 0
    %1061 = vmatpush1.bf16.msra.mxu0 %v290
    %1062 = vmatprep.subr.bf16.mxu0 0
    %1063 = vmatpush1.bf16.msra.mxu0 %v289
    %1064 = vmatprep.subr.bf16.mxu0 0
    %1065 = vmatpush2.bf16.msra.mxu0 0
    %1066 = vmatprep.subr.bf16.mxu0 0
    %1067 = vmatpush2.bf16.msra.mxu0 0
    %1068 = vmatprep.subr.bf16.mxu0 0
    %1069 = vmatpush2.bf16.msra.mxu0 0
    %1070 = vmatprep.subr.bf16.mxu0 0
    %1071 = vmatpush2.bf16.msra.mxu0 0
    %1072 = vmatprep.subr.bf16.mxu0 0
    %1073 = vmatpush2.bf16.msra.mxu0 0
    %1074 = vmatprep.subr.bf16.mxu0 0
    %1075 = vmatpush2.bf16.msra.mxu0 0
    %1076 = vmatprep.subr.bf16.mxu0 0
    %1077 = vmatpush2.bf16.msra.mxu0 0
    %1078 = vmatprep.subr.bf16.mxu0 0
    %1079 = vmatpush2.bf16.msra.mxu0 0
    %1080 = vmatprep.mubr.bf16.mxu0 0
    %1081 = vmatmul.mubr.bf16.gmra.mxu0 %v1046
    %v1082 = vpop.f32.mrf.mxu0
    %v1083 = vadd.f32 0.0, %v1082
    %v1084 = vpop.f32.mrf.mxu0
    %v1085 = vpop.f32.mrf.mxu0
    %v1086 = vpop.f32.mrf.mxu0
    %1087 = vdwg.mxu0
    %1088 = vmatprep.subr.bf16.mxu0 0
    %1089 = vmatpush1.bf16.msra.mxu0 0
    %1090 = vmatprep.subr.bf16.mxu0 0
    %1091 = vmatpush1.bf16.msra.mxu0 0
    %1092 = vmatprep.subr.bf16.mxu0 0
    %1093 = vmatpush1.bf16.msra.mxu0 0
    %1094 = vmatprep.subr.bf16.mxu0 0
    %1095 = vmatpush1.bf16.msra.mxu0 0
    %1096 = vmatprep.subr.bf16.mxu0 0
    %1097 = vmatpush1.bf16.msra.mxu0 0
    %1098 = vmatprep.subr.bf16.mxu0 0
    %1099 = vmatpush1.bf16.msra.mxu0 0
    %1100 = vmatprep.subr.bf16.mxu0 0
    %1101 = vmatpush1.bf16.msra.mxu0 %v345
    %1102 = vmatprep.subr.bf16.mxu0 0
    %1103 = vmatpush1.bf16.msra.mxu0 %v344
    %1104 = vmatprep.subr.bf16.mxu0 0
    %1105 = vmatpush2.bf16.msra.mxu0 0
    %1106 = vmatprep.subr.bf16.mxu0 0
    %1107 = vmatpush2.bf16.msra.mxu0 0
    %1108 = vmatprep.subr.bf16.mxu0 0
    %1109 = vmatpush2.bf16.msra.mxu0 0
    %1110 = vmatprep.subr.bf16.mxu0 0
    %1111 = vmatpush2.bf16.msra.mxu0 0
    %1112 = vmatprep.subr.bf16.mxu0 0
    %1113 = vmatpush2.bf16.msra.mxu0 0
    %1114 = vmatprep.subr.bf16.mxu0 0
    %1115 = vmatpush2.bf16.msra.mxu0 0
    %1116 = vmatprep.subr.bf16.mxu0 0
    %1117 = vmatpush2.bf16.msra.mxu0 0
    %1118 = vmatprep.subr.bf16.mxu0 0
    %1119 = vmatpush2.bf16.msra.mxu0 0
    %1120 = vmatprep.mubr.bf16.mxu0 0
    %1121 = vmatmul.mubr.bf16.gmra.mxu0 %v975
    %v1122 = vpop.f32.mrf.mxu0
    %v1123 = vadd.f32 0.0, %v1122
    %v1124 = vpop.f32.mrf.mxu0
    %v1125 = vpop.f32.mrf.mxu0
    %v1126 = vpop.f32.mrf.mxu0
    %1127 = vdwg.mxu0
    %v1128 = vadd.f32 %v248, %v1123
    %v1129 = vmul.f32 %v1128, 0.5
    %v1130 = vsel %vm132, %v1128, %v1129
    %v1131 = vtanh.pop %v1130
    %v1132 = vmul.f32 %v1131, 0.5
    %v1133 = vadd.f32 %v1132, 0.5
    %v1134 = vsel %vm132, %v1131, %v1133
    %v1135 = vmul.f32 %v1134, %v963
    %1137 = vrot.lane.b32.xlu0 %v1134, 64
    %v1138 = vpop.permute.xlu0 %1137
    %v1140 = vmul.f32 %v1134, %v1138
    %1142 = vrot.lane.b32.xlu0 %v1140, 32
    %v1143 = vpop.permute.xlu0 %1142
    %v1145 = vadd.f32 %v1135, %v1143
    %v1146 = vtanh.pop %v1145
    %1148 = vrot.lane.b32.xlu0 %v1146, 64
    %v1149 = vpop.permute.xlu0 %1148
    %v1151 = vmul.f32 %v1134, %v1149
    %v1152 = vpack.c.bf16 %v1151, %v1151
    %1154 = vrot.lane.b32.xlu0 %v1152, 32
    %v1155 = vpop.permute.xlu0 %1154
    %v1157 = vsel %vm184, %v1155, 0
    %1159 = vmatprep.subr.bf16.mxu0 0
    %1160 = vmatpush1.bf16.msra.mxu0 0
    %1161 = vmatprep.subr.bf16.mxu0 0
    %1162 = vmatpush1.bf16.msra.mxu0 0
    %1163 = vmatprep.subr.bf16.mxu0 0
    %1164 = vmatpush1.bf16.msra.mxu0 0
    %1165 = vmatprep.subr.bf16.mxu0 0
    %1166 = vmatpush1.bf16.msra.mxu0 0
    %1167 = vmatprep.subr.bf16.mxu0 0
    %1168 = vmatpush1.bf16.msra.mxu0 0
    %1169 = vmatprep.subr.bf16.mxu0 0
    %1170 = vmatpush1.bf16.msra.mxu0 0
    %1171 = vmatprep.subr.bf16.mxu0 0
    %1172 = vmatpush1.bf16.msra.mxu0 %v425
    %1173 = vmatprep.subr.bf16.mxu0 0
    %1174 = vmatpush1.bf16.msra.mxu0 %v424
    %1175 = vmatprep.subr.bf16.mxu0 0
    %1176 = vmatpush2.bf16.msra.mxu0 0
    %1177 = vmatprep.subr.bf16.mxu0 0
    %1178 = vmatpush2.bf16.msra.mxu0 0
    %1179 = vmatprep.subr.bf16.mxu0 0
    %1180 = vmatpush2.bf16.msra.mxu0 0
    %1181 = vmatprep.subr.bf16.mxu0 0
    %1182 = vmatpush2.bf16.msra.mxu0 0
    %1183 = vmatprep.subr.bf16.mxu0 0
    %1184 = vmatpush2.bf16.msra.mxu0 0
    %1185 = vmatprep.subr.bf16.mxu0 0
    %1186 = vmatpush2.bf16.msra.mxu0 0
    %1187 = vmatprep.subr.bf16.mxu0 0
    %1188 = vmatpush2.bf16.msra.mxu0 0
    %1189 = vmatprep.subr.bf16.mxu0 0
    %1190 = vmatpush2.bf16.msra.mxu0 0
    %1191 = vmatprep.mubr.bf16.mxu0 0
    %1192 = vmatmul.mubr.bf16.gmra.mxu0 %v1157
    %v1193 = vpop.f32.mrf.mxu0
    %v1194 = vadd.f32 %v1083, %v1193
    %v1195 = vpop.f32.mrf.mxu0
    %v1196 = vpop.f32.mrf.mxu0
    %v1197 = vpop.f32.mrf.mxu0
    %1198 = vdwg.mxu0
    %v1199 = vadd.f32 %v1194, %v279
    %v1200 = vmul.f32 %v1199, 0.5
    %v1201 = vsel %vm132, %v1199, %v1200
    %v1202 = vtanh.pop %v1201
    %v1203 = vmul.f32 %v1202, 0.5
    %v1204 = vadd.f32 %v1203, 0.5
    %v1205 = vsel %vm132, %v1202, %v1204
    %v1206 = vmul.f32 %v1205, %v1034
    %1208 = vrot.lane.b32.xlu0 %v1205, 64
    %v1209 = vpop.permute.xlu0 %1208
    %v1211 = vmul.f32 %v1205, %v1209
    %1213 = vrot.lane.b32.xlu0 %v1211, 32
    %v1214 = vpop.permute.xlu0 %1213
    %v1216 = vadd.f32 %v1206, %v1214
    %v1217 = vtanh.pop %v1216
    %1219 = vrot.lane.b32.xlu0 %v1217, 64
    %v1220 = vpop.permute.xlu0 %1219
    %v1222 = vmul.f32 %v1205, %v1220
    %v1223 = vpack.c.bf16 %v1222, %v1222
    %1225 = vrot.lane.b32.xlu0 %v1223, 32
    %v1226 = vpop.permute.xlu0 %1225
    %v1228 = vsel %vm184, %v1226, 0
    %1230 = vmatprep.subr.bf16.mxu0 0
    %1231 = vmatpush1.bf16.msra.mxu0 0
    %1232 = vmatprep.subr.bf16.mxu0 0
    %1233 = vmatpush1.bf16.msra.mxu0 0
    %1234 = vmatprep.subr.bf16.mxu0 0
    %1235 = vmatpush1.bf16.msra.mxu0 0
    %1236 = vmatprep.subr.bf16.mxu0 0
    %1237 = vmatpush1.bf16.msra.mxu0 0
    %1238 = vmatprep.subr.bf16.mxu0 0
    %1239 = vmatpush1.bf16.msra.mxu0 0
    %1240 = vmatprep.subr.bf16.mxu0 0
    %1241 = vmatpush1.bf16.msra.mxu0 0
    %1242 = vmatprep.subr.bf16.mxu0 0
    %1243 = vmatpush1.bf16.msra.mxu0 %v290
    %1244 = vmatprep.subr.bf16.mxu0 0
    %1245 = vmatpush1.bf16.msra.mxu0 %v289
    %1246 = vmatprep.subr.bf16.mxu0 0
    %1247 = vmatpush2.bf16.msra.mxu0 0
    %1248 = vmatprep.subr.bf16.mxu0 0
    %1249 = vmatpush2.bf16.msra.mxu0 0
    %1250 = vmatprep.subr.bf16.mxu0 0
    %1251 = vmatpush2.bf16.msra.mxu0 0
    %1252 = vmatprep.subr.bf16.mxu0 0
    %1253 = vmatpush2.bf16.msra.mxu0 0
    %1254 = vmatprep.subr.bf16.mxu0 0
    %1255 = vmatpush2.bf16.msra.mxu0 0
    %1256 = vmatprep.subr.bf16.mxu0 0
    %1257 = vmatpush2.bf16.msra.mxu0 0
    %1258 = vmatprep.subr.bf16.mxu0 0
    %1259 = vmatpush2.bf16.msra.mxu0 0
    %1260 = vmatprep.subr.bf16.mxu0 0
    %1261 = vmatpush2.bf16.msra.mxu0 0
    %1262 = vmatprep.mubr.bf16.mxu0 0
    %1263 = vmatmul.mubr.bf16.gmra.mxu0 %v1228
    %v1264 = vpop.f32.mrf.mxu0
    %v1265 = vadd.f32 0.0, %v1264
    %v1266 = vpop.f32.mrf.mxu0
    %v1267 = vpop.f32.mrf.mxu0
    %v1268 = vpop.f32.mrf.mxu0
    %1269 = vdwg.mxu0
    %1270 = vmatprep.subr.bf16.mxu0 0
    %1271 = vmatpush1.bf16.msra.mxu0 0
    %1272 = vmatprep.subr.bf16.mxu0 0
    %1273 = vmatpush1.bf16.msra.mxu0 0
    %1274 = vmatprep.subr.bf16.mxu0 0
    %1275 = vmatpush1.bf16.msra.mxu0 0
    %1276 = vmatprep.subr.bf16.mxu0 0
    %1277 = vmatpush1.bf16.msra.mxu0 0
    %1278 = vmatprep.subr.bf16.mxu0 0
    %1279 = vmatpush1.bf16.msra.mxu0 0
    %1280 = vmatprep.subr.bf16.mxu0 0
    %1281 = vmatpush1.bf16.msra.mxu0 0
    %1282 = vmatprep.subr.bf16.mxu0 0
    %1283 = vmatpush1.bf16.msra.mxu0 %v345
    %1284 = vmatprep.subr.bf16.mxu0 0
    %1285 = vmatpush1.bf16.msra.mxu0 %v344
    %1286 = vmatprep.subr.bf16.mxu0 0
    %1287 = vmatpush2.bf16.msra.mxu0 0
    %1288 = vmatprep.subr.bf16.mxu0 0
    %1289 = vmatpush2.bf16.msra.mxu0 0
    %1290 = vmatprep.subr.bf16.mxu0 0
    %1291 = vmatpush2.bf16.msra.mxu0 0
    %1292 = vmatprep.subr.bf16.mxu0 0
    %1293 = vmatpush2.bf16.msra.mxu0 0
    %1294 = vmatprep.subr.bf16.mxu0 0
    %1295 = vmatpush2.bf16.msra.mxu0 0
    %1296 = vmatprep.subr.bf16.mxu0 0
    %1297 = vmatpush2.bf16.msra.mxu0 0
    %1298 = vmatprep.subr.bf16.mxu0 0
    %1299 = vmatpush2.bf16.msra.mxu0 0
    %1300 = vmatprep.subr.bf16.mxu0 0
    %1301 = vmatpush2.bf16.msra.mxu0 0
    %1302 = vmatprep.mubr.bf16.mxu0 0
    %1303 = vmatmul.mubr.bf16.gmra.mxu0 %v1157
    %v1304 = vpop.f32.mrf.mxu0
    %v1305 = vadd.f32 0.0, %v1304
    %v1306 = vpop.f32.mrf.mxu0
    %v1307 = vpop.f32.mrf.mxu0
    %v1308 = vpop.f32.mrf.mxu0
    %1309 = vdwg.mxu0
    %v1310 = vadd.f32 %v251, %v1305
    %v1311 = vmul.f32 %v1310, 0.5
    %v1312 = vsel %vm132, %v1310, %v1311
    %v1313 = vtanh.pop %v1312
    %v1314 = vmul.f32 %v1313, 0.5
    %v1315 = vadd.f32 %v1314, 0.5
    %v1316 = vsel %vm132, %v1313, %v1315
    %v1317 = vmul.f32 %v1316, %v1145
    %1319 = vrot.lane.b32.xlu0 %v1316, 64
    %v1320 = vpop.permute.xlu0 %1319
    %v1322 = vmul.f32 %v1316, %v1320
    %1324 = vrot.lane.b32.xlu0 %v1322, 32
    %v1325 = vpop.permute.xlu0 %1324
    %v1327 = vadd.f32 %v1317, %v1325
    %v1328 = vtanh.pop %v1327
    %1330 = vrot.lane.b32.xlu0 %v1328, 64
    %v1331 = vpop.permute.xlu0 %1330
    %v1333 = vmul.f32 %v1316, %v1331
    %v1334 = vpack.c.bf16 %v1333, %v1333
    %1336 = vrot.lane.b32.xlu0 %v1334, 32
    %v1337 = vpop.permute.xlu0 %1336
    %v1339 = vsel %vm184, %v1337, 0
    %1341 = vmatprep.subr.bf16.mxu0 0
    %1342 = vmatpush1.bf16.msra.mxu0 0
    %1343 = vmatprep.subr.bf16.mxu0 0
    %1344 = vmatpush1.bf16.msra.mxu0 0
    %1345 = vmatprep.subr.bf16.mxu0 0
    %1346 = vmatpush1.bf16.msra.mxu0 0
    %1347 = vmatprep.subr.bf16.mxu0 0
    %1348 = vmatpush1.bf16.msra.mxu0 0
    %1349 = vmatprep.subr.bf16.mxu0 0
    %1350 = vmatpush1.bf16.msra.mxu0 0
    %1351 = vmatprep.subr.bf16.mxu0 0
    %1352 = vmatpush1.bf16.msra.mxu0 0
    %1353 = vmatprep.subr.bf16.mxu0 0
    %1354 = vmatpush1.bf16.msra.mxu0 %v425
    %1355 = vmatprep.subr.bf16.mxu0 0
    %1356 = vmatpush1.bf16.msra.mxu0 %v424
    %1357 = vmatprep.subr.bf16.mxu0 0
    %1358 = vmatpush2.bf16.msra.mxu0 0
    %1359 = vmatprep.subr.bf16.mxu0 0
    %1360 = vmatpush2.bf16.msra.mxu0 0
    %1361 = vmatprep.subr.bf16.mxu0 0
    %1362 = vmatpush2.bf16.msra.mxu0 0
    %1363 = vmatprep.subr.bf16.mxu0 0
    %1364 = vmatpush2.bf16.msra.mxu0 0
    %1365 = vmatprep.subr.bf16.mxu0 0
    %1366 = vmatpush2.bf16.msra.mxu0 0
    %1367 = vmatprep.subr.bf16.mxu0 0
    %1368 = vmatpush2.bf16.msra.mxu0 0
    %1369 = vmatprep.subr.bf16.mxu0 0
    %1370 = vmatpush2.bf16.msra.mxu0 0
    %1371 = vmatprep.subr.bf16.mxu0 0
    %1372 = vmatpush2.bf16.msra.mxu0 0
    %1373 = vmatprep.mubr.bf16.mxu0 0
    %1374 = vmatmul.mubr.bf16.gmra.mxu0 %v1339
    %v1375 = vpop.f32.mrf.mxu0
    %v1376 = vadd.f32 %v1265, %v1375
    %v1377 = vpop.f32.mrf.mxu0
    %v1378 = vpop.f32.mrf.mxu0
    %v1379 = vpop.f32.mrf.mxu0
    %1380 = vdwg.mxu0
    %v1381 = vadd.f32 %v1376, %v279
    %v1382 = vmul.f32 %v1381, 0.5
    %v1383 = vsel %vm132, %v1381, %v1382
    %v1384 = vtanh.pop %v1383
    %v1385 = vmul.f32 %v1384, 0.5
    %v1386 = vadd.f32 %v1385, 0.5
    %v1387 = vsel %vm132, %v1384, %v1386
    %v1388 = vmul.f32 %v1387, %v1216
    %1390 = vrot.lane.b32.xlu0 %v1387, 64
    %v1391 = vpop.permute.xlu0 %1390
    %v1393 = vmul.f32 %v1387, %v1391
    %1395 = vrot.lane.b32.xlu0 %v1393, 32
    %v1396 = vpop.permute.xlu0 %1395
    %v1398 = vadd.f32 %v1388, %v1396
    %v1399 = vtanh.pop %v1398
    %1401 = vrot.lane.b32.xlu0 %v1399, 64
    %v1402 = vpop.permute.xlu0 %1401
    %v1404 = vmul.f32 %v1387, %v1402
    %v1405 = vpack.c.bf16 %v1404, %v1404
    %1407 = vrot.lane.b32.xlu0 %v1405, 32
    %v1408 = vpop.permute.xlu0 %1407
    %v1410 = vsel %vm184, %v1408, 0
    %1412 = vmatprep.subr.bf16.mxu0 0
    %1413 = vmatpush1.bf16.msra.mxu0 0
    %1414 = vmatprep.subr.bf16.mxu0 0
    %1415 = vmatpush1.bf16.msra.mxu0 0
    %1416 = vmatprep.subr.bf16.mxu0 0
    %1417 = vmatpush1.bf16.msra.mxu0 0
    %1418 = vmatprep.subr.bf16.mxu0 0
    %1419 = vmatpush1.bf16.msra.mxu0 0
    %1420 = vmatprep.subr.bf16.mxu0 0
    %1421 = vmatpush1.bf16.msra.mxu0 0
    %1422 = vmatprep.subr.bf16.mxu0 0
    %1423 = vmatpush1.bf16.msra.mxu0 0
    %1424 = vmatprep.subr.bf16.mxu0 0
    %1425 = vmatpush1.bf16.msra.mxu0 %v290
    %1426 = vmatprep.subr.bf16.mxu0 0
    %1427 = vmatpush1.bf16.msra.mxu0 %v289
    %1428 = vmatprep.subr.bf16.mxu0 0
    %1429 = vmatpush2.bf16.msra.mxu0 0
    %1430 = vmatprep.subr.bf16.mxu0 0
    %1431 = vmatpush2.bf16.msra.mxu0 0
    %1432 = vmatprep.subr.bf16.mxu0 0
    %1433 = vmatpush2.bf16.msra.mxu0 0
    %1434 = vmatprep.subr.bf16.mxu0 0
    %1435 = vmatpush2.bf16.msra.mxu0 0
    %1436 = vmatprep.subr.bf16.mxu0 0
    %1437 = vmatpush2.bf16.msra.mxu0 0
    %1438 = vmatprep.subr.bf16.mxu0 0
    %1439 = vmatpush2.bf16.msra.mxu0 0
    %1440 = vmatprep.subr.bf16.mxu0 0
    %1441 = vmatpush2.bf16.msra.mxu0 0
    %1442 = vmatprep.subr.bf16.mxu0 0
    %1443 = vmatpush2.bf16.msra.mxu0 0
    %1444 = vmatprep.mubr.bf16.mxu0 0
    %1445 = vmatmul.mubr.bf16.gmra.mxu0 %v1410
    %v1446 = vpop.f32.mrf.mxu0
    %v1447 = vadd.f32 0.0, %v1446
    %v1448 = vpop.f32.mrf.mxu0
    %v1449 = vpop.f32.mrf.mxu0
    %v1450 = vpop.f32.mrf.mxu0
    %1451 = vdwg.mxu0
    %1452 = vmatprep.subr.bf16.mxu0 0
    %1453 = vmatpush1.bf16.msra.mxu0 0
    %1454 = vmatprep.subr.bf16.mxu0 0
    %1455 = vmatpush1.bf16.msra.mxu0 0
    %1456 = vmatprep.subr.bf16.mxu0 0
    %1457 = vmatpush1.bf16.msra.mxu0 0
    %1458 = vmatprep.subr.bf16.mxu0 0
    %1459 = vmatpush1.bf16.msra.mxu0 0
    %1460 = vmatprep.subr.bf16.mxu0 0
    %1461 = vmatpush1.bf16.msra.mxu0 0
    %1462 = vmatprep.subr.bf16.mxu0 0
    %1463 = vmatpush1.bf16.msra.mxu0 0
    %1464 = vmatprep.subr.bf16.mxu0 0
    %1465 = vmatpush1.bf16.msra.mxu0 %v345
    %1466 = vmatprep.subr.bf16.mxu0 0
    %1467 = vmatpush1.bf16.msra.mxu0 %v344
    %1468 = vmatprep.subr.bf16.mxu0 0
    %1469 = vmatpush2.bf16.msra.mxu0 0
    %1470 = vmatprep.subr.bf16.mxu0 0
    %1471 = vmatpush2.bf16.msra.mxu0 0
    %1472 = vmatprep.subr.bf16.mxu0 0
    %1473 = vmatpush2.bf16.msra.mxu0 0
    %1474 = vmatprep.subr.bf16.mxu0 0
    %1475 = vmatpush2.bf16.msra.mxu0 0
    %1476 = vmatprep.subr.bf16.mxu0 0
    %1477 = vmatpush2.bf16.msra.mxu0 0
    %1478 = vmatprep.subr.bf16.mxu0 0
    %1479 = vmatpush2.bf16.msra.mxu0 0
    %1480 = vmatprep.subr.bf16.mxu0 0
    %1481 = vmatpush2.bf16.msra.mxu0 0
    %1482 = vmatprep.subr.bf16.mxu0 0
    %1483 = vmatpush2.bf16.msra.mxu0 0
    %1484 = vmatprep.mubr.bf16.mxu0 0
    %1485 = vmatmul.mubr.bf16.gmra.mxu0 %v1339
    %v1486 = vpop.f32.mrf.mxu0
    %v1487 = vadd.f32 0.0, %v1486
    %v1488 = vpop.f32.mrf.mxu0
    %v1489 = vpop.f32.mrf.mxu0
    %v1490 = vpop.f32.mrf.mxu0
    %1491 = vdwg.mxu0
    %v1492 = vadd.f32 %v256, %v1487
    %v1493 = vmul.f32 %v1492, 0.5
    %v1494 = vsel %vm132, %v1492, %v1493
    %v1495 = vtanh.pop %v1494
    %v1496 = vmul.f32 %v1495, 0.5
    %v1497 = vadd.f32 %v1496, 0.5
    %v1498 = vsel %vm132, %v1495, %v1497
    %v1499 = vmul.f32 %v1498, %v1327
    %1501 = vrot.lane.b32.xlu0 %v1498, 64
    %v1502 = vpop.permute.xlu0 %1501
    %v1504 = vmul.f32 %v1498, %v1502
    %1506 = vrot.lane.b32.xlu0 %v1504, 32
    %v1507 = vpop.permute.xlu0 %1506
    %v1509 = vadd.f32 %v1499, %v1507
    %v1510 = vtanh.pop %v1509
    %1512 = vrot.lane.b32.xlu0 %v1510, 64
    %v1513 = vpop.permute.xlu0 %1512
    %v1515 = vmul.f32 %v1498, %v1513
    %v1516 = vpack.c.bf16 %v1515, %v1515
    %1518 = vrot.lane.b32.xlu0 %v1516, 32
    %v1519 = vpop.permute.xlu0 %1518
    %v1521 = vsel %vm184, %v1519, 0
    %1523 = vmatprep.subr.bf16.mxu0 0
    %1524 = vmatpush1.bf16.msra.mxu0 0
    %1525 = vmatprep.subr.bf16.mxu0 0
    %1526 = vmatpush1.bf16.msra.mxu0 0
    %1527 = vmatprep.subr.bf16.mxu0 0
    %1528 = vmatpush1.bf16.msra.mxu0 0
    %1529 = vmatprep.subr.bf16.mxu0 0
    %1530 = vmatpush1.bf16.msra.mxu0 0
    %1531 = vmatprep.subr.bf16.mxu0 0
    %1532 = vmatpush1.bf16.msra.mxu0 0
    %1533 = vmatprep.subr.bf16.mxu0 0
    %1534 = vmatpush1.bf16.msra.mxu0 0
    %1535 = vmatprep.subr.bf16.mxu0 0
    %1536 = vmatpush1.bf16.msra.mxu0 %v425
    %1537 = vmatprep.subr.bf16.mxu0 0
    %1538 = vmatpush1.bf16.msra.mxu0 %v424
    %1539 = vmatprep.subr.bf16.mxu0 0
    %1540 = vmatpush2.bf16.msra.mxu0 0
    %1541 = vmatprep.subr.bf16.mxu0 0
    %1542 = vmatpush2.bf16.msra.mxu0 0
    %1543 = vmatprep.subr.bf16.mxu0 0
    %1544 = vmatpush2.bf16.msra.mxu0 0
    %1545 = vmatprep.subr.bf16.mxu0 0
    %1546 = vmatpush2.bf16.msra.mxu0 0
    %1547 = vmatprep.subr.bf16.mxu0 0
    %1548 = vmatpush2.bf16.msra.mxu0 0
    %1549 = vmatprep.subr.bf16.mxu0 0
    %1550 = vmatpush2.bf16.msra.mxu0 0
    %1551 = vmatprep.subr.bf16.mxu0 0
    %1552 = vmatpush2.bf16.msra.mxu0 0
    %1553 = vmatprep.subr.bf16.mxu0 0
    %1554 = vmatpush2.bf16.msra.mxu0 0
    %1555 = vmatprep.mubr.bf16.mxu0 0
    %1556 = vmatmul.mubr.bf16.gmra.mxu0 %v1521
    %v1557 = vpop.f32.mrf.mxu0
    %v1558 = vadd.f32 %v1447, %v1557
    %v1559 = vpop.f32.mrf.mxu0
    %v1560 = vpop.f32.mrf.mxu0
    %v1561 = vpop.f32.mrf.mxu0
    %1562 = vdwg.mxu0
    %v1563 = vadd.f32 %v1558, %v279
    %v1564 = vmul.f32 %v1563, 0.5
    %v1565 = vsel %vm132, %v1563, %v1564
    %v1566 = vtanh.pop %v1565
    %v1567 = vmul.f32 %v1566, 0.5
    %v1568 = vadd.f32 %v1567, 0.5
    %v1569 = vsel %vm132, %v1566, %v1568
    %v1570 = vmul.f32 %v1569, %v1398
    %1572 = vrot.lane.b32.xlu0 %v1569, 64
    %v1573 = vpop.permute.xlu0 %1572
    %v1575 = vmul.f32 %v1569, %v1573
    %1577 = vrot.lane.b32.xlu0 %v1575, 32
    %v1578 = vpop.permute.xlu0 %1577
    %v1580 = vadd.f32 %v1570, %v1578
    %v1581 = vtanh.pop %v1580
    %1583 = vrot.lane.b32.xlu0 %v1581, 64
    %v1584 = vpop.permute.xlu0 %1583
    %v1586 = vmul.f32 %v1569, %v1584
    %v1587 = vpack.c.bf16 %v1586, %v1586
    %1589 = vrot.lane.b32.xlu0 %v1587, 32
    %v1590 = vpop.permute.xlu0 %1589
    %v1592 = vsel %vm184, %v1590, 0
    %1594 = vmatprep.subr.bf16.mxu0 0
    %1595 = vmatpush1.bf16.msra.mxu0 0
    %1596 = vmatprep.subr.bf16.mxu0 0
    %1597 = vmatpush1.bf16.msra.mxu0 0
    %1598 = vmatprep.subr.bf16.mxu0 0
    %1599 = vmatpush1.bf16.msra.mxu0 0
    %1600 = vmatprep.subr.bf16.mxu0 0
    %1601 = vmatpush1.bf16.msra.mxu0 0
    %1602 = vmatprep.subr.bf16.mxu0 0
    %1603 = vmatpush1.bf16.msra.mxu0 0
    %1604 = vmatprep.subr.bf16.mxu0 0
    %1605 = vmatpush1.bf16.msra.mxu0 0
    %1606 = vmatprep.subr.bf16.mxu0 0
    %1607 = vmatpush1.bf16.msra.mxu0 %v290
    %1608 = vmatprep.subr.bf16.mxu0 0
    %1609 = vmatpush1.bf16.msra.mxu0 %v289
    %1610 = vmatprep.subr.bf16.mxu0 0
    %1611 = vmatpush2.bf16.msra.mxu0 0
    %1612 = vmatprep.subr.bf16.mxu0 0
    %1613 = vmatpush2.bf16.msra.mxu0 0
    %1614 = vmatprep.subr.bf16.mxu0 0
    %1615 = vmatpush2.bf16.msra.mxu0 0
    %1616 = vmatprep.subr.bf16.mxu0 0
    %1617 = vmatpush2.bf16.msra.mxu0 0
    %1618 = vmatprep.subr.bf16.mxu0 0
    %1619 = vmatpush2.bf16.msra.mxu0 0
    %1620 = vmatprep.subr.bf16.mxu0 0
    %1621 = vmatpush2.bf16.msra.mxu0 0
    %1622 = vmatprep.subr.bf16.mxu0 0
    %1623 = vmatpush2.bf16.msra.mxu0 0
    %1624 = vmatprep.subr.bf16.mxu0 0
    %1625 = vmatpush2.bf16.msra.mxu0 0
    %1626 = vmatprep.mubr.bf16.mxu0 0
    %1627 = vmatmul.mubr.bf16.gmra.mxu0 %v1592
    %v1628 = vpop.f32.mrf.mxu0
    %v1629 = vadd.f32 0.0, %v1628
    %v1630 = vpop.f32.mrf.mxu0
    %v1631 = vpop.f32.mrf.mxu0
    %v1632 = vpop.f32.mrf.mxu0
    %1633 = vdwg.mxu0
    %1634 = vmatprep.subr.bf16.mxu0 0
    %1635 = vmatpush1.bf16.msra.mxu0 0
    %1636 = vmatprep.subr.bf16.mxu0 0
    %1637 = vmatpush1.bf16.msra.mxu0 0
    %1638 = vmatprep.subr.bf16.mxu0 0
    %1639 = vmatpush1.bf16.msra.mxu0 0
    %1640 = vmatprep.subr.bf16.mxu0 0
    %1641 = vmatpush1.bf16.msra.mxu0 0
    %1642 = vmatprep.subr.bf16.mxu0 0
    %1643 = vmatpush1.bf16.msra.mxu0 0
    %1644 = vmatprep.subr.bf16.mxu0 0
    %1645 = vmatpush1.bf16.msra.mxu0 0
    %1646 = vmatprep.subr.bf16.mxu0 0
    %1647 = vmatpush1.bf16.msra.mxu0 %v345
    %1648 = vmatprep.subr.bf16.mxu0 0
    %1649 = vmatpush1.bf16.msra.mxu0 %v344
    %1650 = vmatprep.subr.bf16.mxu0 0
    %1651 = vmatpush2.bf16.msra.mxu0 0
    %1652 = vmatprep.subr.bf16.mxu0 0
    %1653 = vmatpush2.bf16.msra.mxu0 0
    %1654 = vmatprep.subr.bf16.mxu0 0
    %1655 = vmatpush2.bf16.msra.mxu0 0
    %1656 = vmatprep.subr.bf16.mxu0 0
    %1657 = vmatpush2.bf16.msra.mxu0 0
    %1658 = vmatprep.subr.bf16.mxu0 0
    %1659 = vmatpush2.bf16.msra.mxu0 0
    %1660 = vmatprep.subr.bf16.mxu0 0
    %1661 = vmatpush2.bf16.msra.mxu0 0
    %1662 = vmatprep.subr.bf16.mxu0 0
    %1663 = vmatpush2.bf16.msra.mxu0 0
    %1664 = vmatprep.subr.bf16.mxu0 0
    %1665 = vmatpush2.bf16.msra.mxu0 0
    %1666 = vmatprep.mubr.bf16.mxu0 0
    %1667 = vmatmul.mubr.bf16.gmra.mxu0 %v1521
    %v1668 = vpop.f32.mrf.mxu0
    %v1669 = vadd.f32 0.0, %v1668
    %v1670 = vpop.f32.mrf.mxu0
    %v1671 = vpop.f32.mrf.mxu0
    %v1672 = vpop.f32.mrf.mxu0
    %1673 = vdwg.mxu0
    %v1674 = vadd.f32 %v259, %v1669
    %v1675 = vmul.f32 %v1674, 0.5
    %v1676 = vsel %vm132, %v1674, %v1675
    %v1677 = vtanh.pop %v1676
    %v1678 = vmul.f32 %v1677, 0.5
    %v1679 = vadd.f32 %v1678, 0.5
    %v1680 = vsel %vm132, %v1677, %v1679
    %v1681 = vmul.f32 %v1680, %v1509
    %1683 = vrot.lane.b32.xlu0 %v1680, 64
    %v1684 = vpop.permute.xlu0 %1683
    %v1686 = vmul.f32 %v1680, %v1684
    %1688 = vrot.lane.b32.xlu0 %v1686, 32
    %v1689 = vpop.permute.xlu0 %1688
    %v1691 = vadd.f32 %v1681, %v1689
    %v1692 = vtanh.pop %v1691
    %1694 = vrot.lane.b32.xlu0 %v1692, 64
    %v1695 = vpop.permute.xlu0 %1694
    %v1697 = vmul.f32 %v1680, %v1695
    %v1698 = vpack.c.bf16 %v1697, %v1697
    %1700 = vrot.lane.b32.xlu0 %v1698, 32
    %v1701 = vpop.permute.xlu0 %1700
    %v1703 = vsel %vm184, %v1701, 0
    %1705 = vmatprep.subr.bf16.mxu0 0
    %1706 = vmatpush1.bf16.msra.mxu0 0
    %1707 = vmatprep.subr.bf16.mxu0 0
    %1708 = vmatpush1.bf16.msra.mxu0 0
    %1709 = vmatprep.subr.bf16.mxu0 0
    %1710 = vmatpush1.bf16.msra.mxu0 0
    %1711 = vmatprep.subr.bf16.mxu0 0
    %1712 = vmatpush1.bf16.msra.mxu0 0
    %1713 = vmatprep.subr.bf16.mxu0 0
    %1714 = vmatpush1.bf16.msra.mxu0 0
    %1715 = vmatprep.subr.bf16.mxu0 0
    %1716 = vmatpush1.bf16.msra.mxu0 0
    %1717 = vmatprep.subr.bf16.mxu0 0
    %1718 = vmatpush1.bf16.msra.mxu0 %v425
    %1719 = vmatprep.subr.bf16.mxu0 0
    %1720 = vmatpush1.bf16.msra.mxu0 %v424
    %1721 = vmatprep.subr.bf16.mxu0 0
    %1722 = vmatpush2.bf16.msra.mxu0 0
    %1723 = vmatprep.subr.bf16.mxu0 0
    %1724 = vmatpush2.bf16.msra.mxu0 0
    %1725 = vmatprep.subr.bf16.mxu0 0
    %1726 = vmatpush2.bf16.msra.mxu0 0
    %1727 = vmatprep.subr.bf16.mxu0 0
    %1728 = vmatpush2.bf16.msra.mxu0 0
    %1729 = vmatprep.subr.bf16.mxu0 0
    %1730 = vmatpush2.bf16.msra.mxu0 0
    %1731 = vmatprep.subr.bf16.mxu0 0
    %1732 = vmatpush2.bf16.msra.mxu0 0
    %1733 = vmatprep.subr.bf16.mxu0 0
    %1734 = vmatpush2.bf16.msra.mxu0 0
    %1735 = vmatprep.subr.bf16.mxu0 0
    %1736 = vmatpush2.bf16.msra.mxu0 0
    %1737 = vmatprep.mubr.bf16.mxu0 0
    %1738 = vmatmul.mubr.bf16.gmra.mxu0 %v1703
    %v1739 = vpop.f32.mrf.mxu0
    %v1740 = vadd.f32 %v1629, %v1739
    %v1741 = vpop.f32.mrf.mxu0
    %v1742 = vpop.f32.mrf.mxu0
    %v1743 = vpop.f32.mrf.mxu0
    %1744 = vdwg.mxu0
    %v1745 = vadd.f32 %v1740, %v279
    %v1746 = vmul.f32 %v1745, 0.5
    %v1747 = vsel %vm132, %v1745, %v1746
    %v1748 = vtanh.pop %v1747
    %v1749 = vmul.f32 %v1748, 0.5
    %v1750 = vadd.f32 %v1749, 0.5
    %v1751 = vsel %vm132, %v1748, %v1750
    %v1752 = vmul.f32 %v1751, %v1580
    %1754 = vrot.lane.b32.xlu0 %v1751, 64
    %v1755 = vpop.permute.xlu0 %1754
    %v1757 = vmul.f32 %v1751, %v1755
    %1759 = vrot.lane.b32.xlu0 %v1757, 32
    %v1760 = vpop.permute.xlu0 %1759
    %v1762 = vadd.f32 %v1752, %v1760
    %v1763 = vtanh.pop %v1762
    %1765 = vrot.lane.b32.xlu0 %v1763, 64
    %v1766 = vpop.permute.xlu0 %1765
    %v1768 = vmul.f32 %v1751, %v1766
    %v1769 = vpack.c.bf16 %v1768, %v1768
    %v1770 = vld [vmem:[#allocation10] sm:$0xf]
    %v1771 = vld [vmem:[#allocation10 + $0x4] sm:$0xf]
    %v1772 = vld [vmem:[#allocation10 + $0x8] sm:$0xf]
    %v1773 = vld [vmem:[#allocation10 + $0xc] sm:$0xf]
    %v1774 = vld [vmem:[#allocation12] sm:$0x1]
    %v1776 = vlaneseq
    %v1777 = vshrl.u32 %v1776, 7
    %v1778 = vsub.s32 0, %v1777
    %v1779 = vrot.slane %v1774, %v1778
    %1782 = vrot.lane.b32.xlu0 %v1769, 32
    %v1783 = vpop.permute.xlu0 %1782
    %v1788 = vunpack.c.l.b16 %v1770
    %v1789 = vunpack.c.l.b16 %v1771
    %v1790 = vunpack.c.l.b16 %v1772
    %v1791 = vunpack.c.l.b16 %v1773
    %v1792 = vpack.c.b16 %v1789, %v1788
    %v1793 = vpack.c.b16 %v1791, %v1790
    %v1797 = vsel %vm184, %v1783, 0
    %1799 = vmatprep.subr.bf16.mxu0 0
    %1800 = vmatpush1.bf16.msra.mxu0 0
    %1801 = vmatprep.subr.bf16.mxu0 0
    %1802 = vmatpush1.bf16.msra.mxu0 0
    %1803 = vmatprep.subr.bf16.mxu0 0
    %1804 = vmatpush1.bf16.msra.mxu0 0
    %1805 = vmatprep.subr.bf16.mxu0 0
    %1806 = vmatpush1.bf16.msra.mxu0 0
    %1807 = vmatprep.subr.bf16.mxu0 0
    %1808 = vmatpush1.bf16.msra.mxu0 0
    %1809 = vmatprep.subr.bf16.mxu0 0
    %1810 = vmatpush1.bf16.msra.mxu0 0
    %1811 = vmatprep.subr.bf16.mxu0 0
    %1812 = vmatpush1.bf16.msra.mxu0 %v1793
    %1813 = vmatprep.subr.bf16.mxu0 0
    %1814 = vmatpush1.bf16.msra.mxu0 %v1792
    %1815 = vmatprep.subr.bf16.mxu0 0
    %1816 = vmatpush2.bf16.msra.mxu0 0
    %1817 = vmatprep.subr.bf16.mxu0 0
    %1818 = vmatpush2.bf16.msra.mxu0 0
    %1819 = vmatprep.subr.bf16.mxu0 0
    %1820 = vmatpush2.bf16.msra.mxu0 0
    %1821 = vmatprep.subr.bf16.mxu0 0
    %1822 = vmatpush2.bf16.msra.mxu0 0
    %1823 = vmatprep.subr.bf16.mxu0 0
    %1824 = vmatpush2.bf16.msra.mxu0 0
    %1825 = vmatprep.subr.bf16.mxu0 0
    %1826 = vmatpush2.bf16.msra.mxu0 0
    %1827 = vmatprep.subr.bf16.mxu0 0
    %1828 = vmatpush2.bf16.msra.mxu0 0
    %1829 = vmatprep.subr.bf16.mxu0 0
    %1830 = vmatpush2.bf16.msra.mxu0 0
    %1831 = vmatprep.mubr.bf16.mxu0 0
    %1832 = vmatmul.mubr.bf16.gmra.mxu0 %v1797
    %v1833 = vpop.f32.mrf.mxu0
    %v1834 = vadd.f32 %v1779, %v1833
    %v1835 = vpop.f32.mrf.mxu0
    %v1836 = vpop.f32.mrf.mxu0
    %v1837 = vpop.f32.mrf.mxu0
    %1838 = vdwg.mxu0
    %vm1839 = vcmp.ge.f32.partialorder %v1834, 0.0
    %v1840 = vmul.f32 %v1834, 0.2
    %v1841 = vsel %vm1839, %v1834, %v1840
    %v1842 = vpack.c.bf16 %v1841, %v1841
    %v1843 = vld [vmem:[%s9] sm:$0xf]
    %v1844 = vld [vmem:[%s9 + $0x4] sm:$0xf]
    %v1845 = vld [vmem:[%s9 + $0x8] sm:$0xf]
    %v1846 = vld [vmem:[%s9 + $0xc] sm:$0xf]
    %v1847 = vld [vmem:[%s9 + $0x10] sm:$0xf]
    %v1848 = vld [vmem:[%s9 + $0x14] sm:$0xf]
    %v1849 = vld [vmem:[%s9 + $0x18] sm:$0xf]
    %v1850 = vld [vmem:[%s9 + $0x1c] sm:$0xf]
    %v1851 = vld [vmem:[%s9 + $0x20] sm:$0xf]
    %v1852 = vld [vmem:[%s9 + $0x24] sm:$0xf]
    %v1853 = vld [vmem:[%s9 + $0x28] sm:$0xf]
    %v1854 = vld [vmem:[%s9 + $0x2c] sm:$0xf]
    %v1855 = vld [vmem:[%s9 + $0x30] sm:$0xf]
    %v1856 = vld [vmem:[%s9 + $0x34] sm:$0xf]
    %v1857 = vld [vmem:[%s9 + $0x38] sm:$0xf]
    %v1858 = vld [vmem:[%s9 + $0x3c] sm:$0xf]
    %v1859 = vld [vmem:[%s10] sm:$0x1]
    %v1861 = vlaneseq
    %v1862 = vshrl.u32 %v1861, 7
    %v1863 = vsub.s32 0, %v1862
    %v1864 = vrot.slane %v1859, %v1863
    %v1882 = vunpack.c.l.b16 %v1843
    %v1883 = vunpack.c.l.b16 %v1844
    %v1884 = vunpack.c.l.b16 %v1845
    %v1885 = vunpack.c.l.b16 %v1846
    %v1886 = vunpack.c.l.b16 %v1847
    %v1887 = vunpack.c.l.b16 %v1848
    %v1888 = vunpack.c.l.b16 %v1849
    %v1889 = vunpack.c.l.b16 %v1850
    %v1890 = vunpack.c.l.b16 %v1851
    %v1891 = vunpack.c.l.b16 %v1852
    %v1892 = vunpack.c.l.b16 %v1853
    %v1893 = vunpack.c.l.b16 %v1854
    %v1894 = vunpack.c.l.b16 %v1855
    %v1895 = vunpack.c.l.b16 %v1856
    %v1896 = vunpack.c.l.b16 %v1857
    %v1897 = vunpack.c.l.b16 %v1858
    %v1898 = vpack.c.b16 %v1883, %v1882
    %v1899 = vpack.c.b16 %v1885, %v1884
    %v1900 = vpack.c.b16 %v1887, %v1886
    %v1901 = vpack.c.b16 %v1889, %v1888
    %v1902 = vpack.c.b16 %v1891, %v1890
    %v1903 = vpack.c.b16 %v1893, %v1892
    %v1904 = vpack.c.b16 %v1895, %v1894
    %v1905 = vpack.c.b16 %v1897, %v1896
    %1914 = vmatprep.subr.bf16.mxu0 0
    %1915 = vmatpush1.bf16.msra.mxu0 %v1905
    %1916 = vmatprep.subr.bf16.mxu0 0
    %1917 = vmatpush1.bf16.msra.mxu0 %v1904
    %1918 = vmatprep.subr.bf16.mxu0 0
    %1919 = vmatpush1.bf16.msra.mxu0 %v1903
    %1920 = vmatprep.subr.bf16.mxu0 0
    %1921 = vmatpush1.bf16.msra.mxu0 %v1902
    %1922 = vmatprep.subr.bf16.mxu0 0
    %1923 = vmatpush1.bf16.msra.mxu0 %v1901
    %1924 = vmatprep.subr.bf16.mxu0 0
    %1925 = vmatpush1.bf16.msra.mxu0 %v1900
    %1926 = vmatprep.subr.bf16.mxu0 0
    %1927 = vmatpush1.bf16.msra.mxu0 %v1899
    %1928 = vmatprep.subr.bf16.mxu0 0
    %1929 = vmatpush1.bf16.msra.mxu0 %v1898
    %1930 = vmatprep.subr.bf16.mxu0 0
    %1931 = vmatpush2.bf16.msra.mxu0 0
    %1932 = vmatprep.subr.bf16.mxu0 0
    %1933 = vmatpush2.bf16.msra.mxu0 0
    %1934 = vmatprep.subr.bf16.mxu0 0
    %1935 = vmatpush2.bf16.msra.mxu0 0
    %1936 = vmatprep.subr.bf16.mxu0 0
    %1937 = vmatpush2.bf16.msra.mxu0 0
    %1938 = vmatprep.subr.bf16.mxu0 0
    %1939 = vmatpush2.bf16.msra.mxu0 0
    %1940 = vmatprep.subr.bf16.mxu0 0
    %1941 = vmatpush2.bf16.msra.mxu0 0
    %1942 = vmatprep.subr.bf16.mxu0 0
    %1943 = vmatpush2.bf16.msra.mxu0 0
    %1944 = vmatprep.subr.bf16.mxu0 0
    %1945 = vmatpush2.bf16.msra.mxu0 0
    %1946 = vmatprep.mubr.bf16.mxu0 0
    %1947 = vmatmul.mubr.bf16.gmra.mxu0 %v1842
    %v1948 = vpop.f32.mrf.mxu0
    %v1949 = vadd.f32 %v1864, %v1948
    %v1950 = vpop.f32.mrf.mxu0
    %v1951 = vpop.f32.mrf.mxu0
    %v1952 = vpop.f32.mrf.mxu0
    %1953 = vdwg.mxu0
    %1954 = vst [vmem:[%s11] sm:$0xff] %v1949
    // Predicated region
    $region74: #{lstm_forward.1} parent=1 // pred_check
      _
    $region75: #{lstm_forward.1} parent=1 // pred_check_branch
      %1956 = sbr.rel (0) target = $region77
    $region76: #{lstm_forward.1} parent=1 // pred_region
      _
    $region77: #{lstm_forward.1} parent=1 // pred_fallthru
      _
    // Predicated region
    $region78: #{lstm_forward.1} parent=1 // pred_check
      _
    $region79: #{lstm_forward.1} parent=1 // pred_check_branch
      %1958 = sbr.rel (0) target = $region81
    $region80: #{lstm_forward.1} parent=1 // pred_region
      _
    $region81: #{lstm_forward.1} parent=1 // pred_fallthru
      _
    %1959 = vsyncpa [#allocation3], 1
    %1960 = vsyncpa [#allocation5], 1
    %1961 = vsyncpa [#allocation8], 1
    %1962 = vsyncpa [#allocation11], 1

</llo_original>
